<compile_context>
chip_gen: v7x
topology: tpu7x:2x2x1
jax: 0.10.0
libtpu: 0.0.40
codegen_flags: <defaults>
</compile_context>

<pallas_src>
import functools

import jax
import jax.numpy as jnp
from jax import lax
from jax.experimental import pallas as pl
from jax.experimental.pallas import tpu as pltpu


def _conv_bn_mish_kernel(x_ref, w_ref, scale_ref, shift_ref, o_ref, acc_ref,
                         *, kh, kw, stride, wcb):
    """One (batch, C_out-tile, C_in-tile) grid step.

    x_ref:     (stride, ci_tile, Lc)     bf16  column-phase flat input
    w_ref:     (kh*kw, co_tile, ci_tile) bf16  per-tap filter matrices
    scale_ref: (co_tile, 1) f32          folded BN scale
    shift_ref: (co_tile, 1) f32          folded BN shift
    o_ref:     (co_tile, Mo_p)           output tile (batch dim squeezed)
    acc_ref:   (co_tile, Mo_p) f32       scratch, persists across C_in axis
    """
    k = pl.program_id(2)

    @pl.when(k == 0)
    def _():
        acc_ref[...] = jnp.zeros_like(acc_ref)

    mo = acc_ref.shape[-1]
    acc = jnp.zeros(acc_ref.shape, jnp.float32)
    # In-kernel im2col: every tap is a static lane-shifted VMEM slice feeding
    # one MXU matmul; accumulation stays in f32 registers / VMEM scratch.
    for dy in range(kh):
        for dx in range(kw):
            b = dx % stride                    # column phase of this tap
            off = dy * wcb + dx // stride      # static flat offset
            patch = x_ref[b, :, pl.ds(off, mo)]            # (ci_tile, mo) bf16
            acc = acc + jnp.dot(w_ref[dy * kw + dx], patch,
                                preferred_element_type=jnp.float32)
    acc_ref[...] += acc

    @pl.when(k == pl.num_programs(2) - 1)
    def _():
        # Inference BatchNorm folded to per-channel scale + shift (VPU).
        y = acc_ref[...] * scale_ref[...] + shift_ref[...]
        # Mish with a single EUP exp + approx EUP reciprocal:
        #   mish(y) = y * tanh(softplus(y)) = y * t / (t + 2),  t = e*(e+2).
        # The clamp keeps e*e finite; for y >= 20 the ratio is already 1 in f32.
        e = jnp.exp(jnp.minimum(y, 20.0))
        t = e * (e + 2.0)
        o_ref[...] = (y * (t * pl.reciprocal(t + 2.0, approx=True))).astype(o_ref.dtype)


@functools.partial(jax.jit, static_argnames=("stride", "padding", "eps"))
def bn_conv_mish(x, bn_gamma_conv_w=None, *unused, **_):  # placeholder guard
    raise NotImplementedError


@functools.partial(jax.jit, static_argnames=("stride", "padding", "eps"))
def bn_conv_mish(x, conv_w, bn_gamma, bn_beta, bn_mean, bn_var,
                 *, stride=1, padding=1, eps=1e-5):
    """Forward pass of BN_Conv_Mish. x: (N, C_in, H, W), conv_w: (C_out, C_in, kh, kw)."""
    N, C_in, H, W = x.shape
    C_out, C_in_w, kh, kw = conv_w.shape
    assert C_in == C_in_w
    s, p = int(stride), int(padding)

    Hp, Wp = H + 2 * p, W + 2 * p
    Ho = (Hp - kh) // s + 1
    Wo = (Wp - kw) // s + 1

    LANE, SUB = 128, 8

    # ---- BatchNorm (running stats) folded to per-channel scale / shift (f32)
    scale = bn_gamma.astype(jnp.float32) / jnp.sqrt(bn_var.astype(jnp.float32) + eps)
    shift = bn_beta.astype(jnp.float32) - bn_mean.astype(jnp.float32) * scale

    # ---- channel tiling ------------------------------------------------------
    if C_out <= 256:
        C_out_p = pl.cdiv(C_out, SUB) * SUB
        co_tile = C_out_p
    else:                               # parallel C_out tiles (also helps v7x megacore)
        co_tile = 256
        C_out_p = pl.cdiv(C_out, co_tile) * co_tile
    if C_in <= 256:
        C_in_p = C_in
        ci_tile = C_in
    else:                               # lane-aligned contraction tiles bound VMEM
        ci_tile = 128
        C_in_p = pl.cdiv(C_in, ci_tile) * ci_tile

    # ---- column-phase flat layout of the padded input (enables in-kernel im2col)
    # Phase b holds input columns b, b+s, ...  For tap (dy, dx) the value needed
    # at flat output position q = y*Wr + x is phase[dx % s] at index
    # q + (dy*Wcb + dx//s): a contiguous slice, no gather, no read amplification.
    Wcb = pl.cdiv(Wp, s)                # phase-image width
    Wr = s * Wcb                        # flat row stride of the output grid
    Mo = (Ho - 1) * Wr + Wo             # valid flat output extent per image
    Mo_p = pl.cdiv(Mo, LANE) * LANE     # lane-dense output width
    max_off = (kh - 1) * Wcb + (kw - 1) // s
    Lc = max_off + Mo_p                 # flat input length each tap may slice

    xb = x.astype(jnp.bfloat16)         # bf16 operands, f32 accumulation
    xp = jnp.pad(xb, ((0, 0), (0, 0), (p, p), (p, p)))
    phases = []
    for b in range(s):
        ph = xp[:, :, :, b::s]                                  # (N, C_in, Hp, <=Wcb)
        if ph.shape[-1] < Wcb:
            ph = jnp.pad(ph, ((0, 0), (0, 0), (0, 0), (0, Wcb - ph.shape[-1])))
        phases.append(ph)
    xph = jnp.stack(phases, axis=1).reshape(N, s, C_in, Hp * Wcb)
    if C_in_p != C_in:
        xph = jnp.pad(xph, ((0, 0), (0, 0), (0, C_in_p - C_in), (0, 0)))
    L0 = Hp * Wcb
    if L0 < Lc:
        xph = jnp.pad(xph, ((0, 0), (0, 0), (0, 0), (0, Lc - L0)))
    elif L0 > Lc:
        xph = xph[..., :Lc]             # tail never read by any tap

    # ---- weights as per-tap (C_out_p, C_in_p) bf16 matrices ------------------
    wt = conv_w.astype(jnp.bfloat16).transpose(2, 3, 0, 1).reshape(kh * kw, C_out, C_in)
    wt = jnp.pad(wt, ((0, 0), (0, C_out_p - C_out), (0, C_in_p - C_in)))

    scale2d = jnp.pad(scale, (0, C_out_p - C_out)).reshape(C_out_p, 1)
    shift2d = jnp.pad(shift, (0, C_out_p - C_out)).reshape(C_out_p, 1)

    grid = (N, C_out_p // co_tile, C_in_p // ci_tile)

    # VMEM footprint: double-buffered input/weight/output blocks + f32 accumulator.
    out_bytes = jnp.dtype(x.dtype).itemsize
    vmem_need = (2 * s * ci_tile * Lc * 2
                 + 2 * kh * kw * co_tile * ci_tile * 2
                 + 2 * co_tile * Mo_p * out_bytes
                 + co_tile * Mo_p * 4
                 + 4 * co_tile * 4)
    vmem_limit = int(min(96 * 2 ** 20, max(32 * 2 ** 20, 2 * vmem_need)))

    kernel = functools.partial(_conv_bn_mish_kernel, kh=kh, kw=kw, stride=s, wcb=Wcb)
    out3d = pl.pallas_call(
        kernel,
        out_shape=jax.ShapeDtypeStruct((N, C_out_p, Mo_p), x.dtype),
        grid_spec=pltpu.PrefetchScalarGridSpec(
            num_scalar_prefetch=0,
            grid=grid,
            in_specs=[
                pl.BlockSpec((None, s, ci_tile, Lc), lambda n, co, k: (n, 0, k, 0)),
                pl.BlockSpec((kh * kw, co_tile, ci_tile), lambda n, co, k: (0, co, k)),
                pl.BlockSpec((co_tile, 1), lambda n, co, k: (co, 0)),
                pl.BlockSpec((co_tile, 1), lambda n, co, k: (co, 0)),
            ],
            out_specs=pl.BlockSpec((None, co_tile, Mo_p), lambda n, co, k: (n, co, 0)),
            scratch_shapes=[pltpu.VMEM((co_tile, Mo_p), jnp.float32)],
        ),
        compiler_params=pltpu.CompilerParams(
            dimension_semantics=("parallel", "parallel", "arbitrary"),
            vmem_limit_bytes=vmem_limit,
        ),
    )(xph, wt, scale2d, shift2d)

    # Valid outputs live at flat positions q = y*Wr + x with x < Wo; padded
    # channels / lanes and the wrap ("junk") columns are dropped here.
    out = out3d[:, :C_out, :]
    full = Ho * Wr
    if Mo_p < full:
        out = jnp.pad(out, ((0, 0), (0, 0), (0, full - Mo_p)))
    else:
        out = out[..., :full]
    return out.reshape(N, C_out, Ho, Wr)[:, :, :, :Wo]


def bn_conv_mish_ref(x, conv_w, gamma, beta, mean, var, *, stride=1, padding=1, eps=1e-5):
    """Pure-JAX reference matching the PyTorch module (inference-mode BN)."""
    y = lax.conv_general_dilated(
        x, conv_w, window_strides=(stride, stride),
        padding=[(padding, padding), (padding, padding)],
        dimension_numbers=("NCHW", "OIHW", "NCHW"))
    y = (y - mean[None, :, None, None]) / jnp.sqrt(var[None, :, None, None] + eps)
    y = y * gamma[None, :, None, None] + beta[None, :, None, None]
    return y * jnp.tanh(jax.nn.softplus(y))


if __name__ == "__main__":
    key = jax.random.PRNGKey(0)
    k_x, k_w, k_g, k_b, k_m, k_v = jax.random.split(key, 6)

    N, C_in, H, W = 2, 4, 16, 16
    C_out, ksize, stride, padding = 8, 3, 1, 1

    # Round test data to bf16-representable f32 values so the bf16-operand
    # matmul path introduces no extra quantization error in the check.
    def q(a):
        return a.astype(jnp.bfloat16).astype(jnp.float32)

    x = q(jax.random.normal(k_x, (N, C_in, H, W), dtype=jnp.float32))          # NCHW
    conv_w = q(0.1 * jax.random.normal(k_w, (C_out, C_in, ksize, ksize),
                                       dtype=jnp.float32))                     # OIHW
    gamma = q(1.0 + 0.1 * jax.random.normal(k_g, (C_out,), dtype=jnp.float32))
    beta = q(0.1 * jax.random.normal(k_b, (C_out,), dtype=jnp.float32))
    mean = q(0.1 * jax.random.normal(k_m, (C_out,), dtype=jnp.float32))
    var = q(1.0 + 0.5 * jax.random.uniform(k_v, (C_out,), dtype=jnp.float32))

    out = bn_conv_mish(x, conv_w, gamma, beta, mean, var,
                       stride=stride, padding=padding)
    jax.block_until_ready(out)

    ref = bn_conv_mish_ref(x, conv_w, gamma, beta, mean, var,
                           stride=stride, padding=padding)
    assert out.shape == (N, C_out, H, W) and out.dtype == x.dtype
    # Tolerance covers f32-accumulation order differences and the approx EUP
    # reciprocal in the Mish epilogue (relative error ~1e-4).
    assert jnp.allclose(out, ref, atol=2e-3, rtol=2e-3), (
        "mismatch vs reference, max abs err = "
        f"{float(jnp.max(jnp.abs(out - ref)))}")

    print("KERNEL_OK")
</pallas_src>

<mosaic_0001>
module attributes {stable_mosaic.version = 11 : i64} {
  func.func @_conv_bn_mish_kernel(%arg0: i32, %arg1: i32, %arg2: i32, %arg3: memref<1x1x4x422xbf16, #tpu.memory_space<vmem>>, %arg4: memref<9x8x4xbf16, #tpu.memory_space<vmem>>, %arg5: memref<8x1xf32, #tpu.memory_space<vmem>>, %arg6: memref<8x1xf32, #tpu.memory_space<vmem>>, %arg7: memref<1x8x384xf32, #tpu.memory_space<vmem>>, %arg8: memref<8x384xf32, #tpu.memory_space<vmem>>) attributes {dimension_semantics = [#tpu.dimension_semantics<parallel>, #tpu.dimension_semantics<parallel>, #tpu.dimension_semantics<arbitrary>], iteration_bounds = array<i64: 2, 1, 1>, scalar_prefetch = 0 : i64, scratch_operands = 1 : i64, tpu.core_type = #tpu.core_type<tc>, window_params = [{transform_indices = @transform_0, window_bounds = array<i64: 1, 1, 4, 422>}, {transform_indices = @transform_1, window_bounds = array<i64: 9, 8, 4>}, {transform_indices = @transform_2, window_bounds = array<i64: 8, 1>}, {transform_indices = @transform_3, window_bounds = array<i64: 8, 1>}, {transform_indices = @transform_4, window_bounds = array<i64: 1, 8, 384>}]} {
    %c0_i32 = arith.constant 0 : i32
    %0 = arith.cmpi eq, %arg2, %c0_i32 : i32
    %1 = arith.extui %0 : i1 to i32
    %c0_i32_0 = arith.constant 0 : i32
    %2 = arith.cmpi ne, %1, %c0_i32_0 : i32
    scf.if %2 {
      %cst_64 = arith.constant 0.000000e+00 : f32
      %64 = vector.broadcast %cst_64 : f32 to vector<8x384xf32>
      %c0_65 = arith.constant 0 : index
      %c0_66 = arith.constant 0 : index
      %65 = vector.load %arg8[%c0_65, %c0_66] : memref<8x384xf32, #tpu.memory_space<vmem>>, vector<8x384xf32>
      tpu.vector_store %arg8[%c0_65, %c0_66], %64 {strides = array<i32>} : memref<8x384xf32, #tpu.memory_space<vmem>>, vector<8x384xf32>,
    } else {
    }
    %cst = arith.constant 0.000000e+00 : f32
    %3 = vector.broadcast %cst : f32 to vector<8x384xf32>
    %c0 = arith.constant 0 : index
    %c0_1 = arith.constant 0 : index
    %c0_2 = arith.constant 0 : index
    %c0_3 = arith.constant 0 : index
    %4 = vector.load %arg3[%c0, %c0_1, %c0_2, %c0_3] : memref<1x1x4x422xbf16, #tpu.memory_space<vmem>>, vector<1x1x4x384xbf16>
    %5 = vector.shape_cast %4 : vector<1x1x4x384xbf16> to vector<4x384xbf16>
    %c0_4 = arith.constant 0 : index
    %c0_5 = arith.constant 0 : index
    %c0_6 = arith.constant 0 : index
    %6 = vector.load %arg4[%c0_4, %c0_5, %c0_6] : memref<9x8x4xbf16, #tpu.memory_space<vmem>>, vector<1x8x4xbf16>
    %7 = vector.shape_cast %6 : vector<1x8x4xbf16> to vector<8x4xbf16>
    %cst_7 = arith.constant dense<0.000000e+00> : vector<8x384xf32>
    %8 = tpu.matmul %7, %5, %cst_7 {dimension_numbers = #tpu.dot_dimension_numbers<[1], [0], [0], [1], [0, 0, 1, 1], [], []>} : vector<8x4xbf16>, vector<4x384xbf16>, vector<8x384xf32> -> vector<8x384xf32>
    %9 = arith.addf %3, %8 : vector<8x384xf32>
    %c0_8 = arith.constant 0 : index
    %c0_9 = arith.constant 0 : index
    %c0_10 = arith.constant 0 : index
    %c1 = arith.constant 1 : index
    %10 = vector.load %arg3[%c0_8, %c0_9, %c0_10, %c1] : memref<1x1x4x422xbf16, #tpu.memory_space<vmem>>, vector<1x1x4x384xbf16>
    %11 = vector.shape_cast %10 : vector<1x1x4x384xbf16> to vector<4x384xbf16>
    %c1_11 = arith.constant 1 : index
    %c0_12 = arith.constant 0 : index
    %c0_13 = arith.constant 0 : index
    %12 = vector.load %arg4[%c1_11, %c0_12, %c0_13] : memref<9x8x4xbf16, #tpu.memory_space<vmem>>, vector<1x8x4xbf16>
    %13 = vector.shape_cast %12 : vector<1x8x4xbf16> to vector<8x4xbf16>
    %cst_14 = arith.constant dense<0.000000e+00> : vector<8x384xf32>
    %14 = tpu.matmul %13, %11, %cst_14 {dimension_numbers = #tpu.dot_dimension_numbers<[1], [0], [0], [1], [0, 0, 1, 1], [], []>} : vector<8x4xbf16>, vector<4x384xbf16>, vector<8x384xf32> -> vector<8x384xf32>
    %15 = arith.addf %9, %14 : vector<8x384xf32>
    %c0_15 = arith.constant 0 : index
    %c0_16 = arith.constant 0 : index
    %c0_17 = arith.constant 0 : index
    %c2 = arith.constant 2 : index
    %16 = vector.load %arg3[%c0_15, %c0_16, %c0_17, %c2] : memref<1x1x4x422xbf16, #tpu.memory_space<vmem>>, vector<1x1x4x384xbf16>
    %17 = vector.shape_cast %16 : vector<1x1x4x384xbf16> to vector<4x384xbf16>
    %c2_18 = arith.constant 2 : index
    %c0_19 = arith.constant 0 : index
    %c0_20 = arith.constant 0 : index
    %18 = vector.load %arg4[%c2_18, %c0_19, %c0_20] : memref<9x8x4xbf16, #tpu.memory_space<vmem>>, vector<1x8x4xbf16>
    %19 = vector.shape_cast %18 : vector<1x8x4xbf16> to vector<8x4xbf16>
    %cst_21 = arith.constant dense<0.000000e+00> : vector<8x384xf32>
    %20 = tpu.matmul %19, %17, %cst_21 {dimension_numbers = #tpu.dot_dimension_numbers<[1], [0], [0], [1], [0, 0, 1, 1], [], []>} : vector<8x4xbf16>, vector<4x384xbf16>, vector<8x384xf32> -> vector<8x384xf32>
    %21 = arith.addf %15, %20 : vector<8x384xf32>
    %c0_22 = arith.constant 0 : index
    %c0_23 = arith.constant 0 : index
    %c0_24 = arith.constant 0 : index
    %c18 = arith.constant 18 : index
    %22 = vector.load %arg3[%c0_22, %c0_23, %c0_24, %c18] : memref<1x1x4x422xbf16, #tpu.memory_space<vmem>>, vector<1x1x4x384xbf16>
    %23 = vector.shape_cast %22 : vector<1x1x4x384xbf16> to vector<4x384xbf16>
    %c3 = arith.constant 3 : index
    %c0_25 = arith.constant 0 : index
    %c0_26 = arith.constant 0 : index
    %24 = vector.load %arg4[%c3, %c0_25, %c0_26] : memref<9x8x4xbf16, #tpu.memory_space<vmem>>, vector<1x8x4xbf16>
    %25 = vector.shape_cast %24 : vector<1x8x4xbf16> to vector<8x4xbf16>
    %cst_27 = arith.constant dense<0.000000e+00> : vector<8x384xf32>
    %26 = tpu.matmul %25, %23, %cst_27 {dimension_numbers = #tpu.dot_dimension_numbers<[1], [0], [0], [1], [0, 0, 1, 1], [], []>} : vector<8x4xbf16>, vector<4x384xbf16>, vector<8x384xf32> -> vector<8x384xf32>
    %27 = arith.addf %21, %26 : vector<8x384xf32>
    %c0_28 = arith.constant 0 : index
    %c0_29 = arith.constant 0 : index
    %c0_30 = arith.constant 0 : index
    %c19 = arith.constant 19 : index
    %28 = vector.load %arg3[%c0_28, %c0_29, %c0_30, %c19] : memref<1x1x4x422xbf16, #tpu.memory_space<vmem>>, vector<1x1x4x384xbf16>
    %29 = vector.shape_cast %28 : vector<1x1x4x384xbf16> to vector<4x384xbf16>
    %c4 = arith.constant 4 : index
    %c0_31 = arith.constant 0 : index
    %c0_32 = arith.constant 0 : index
    %30 = vector.load %arg4[%c4, %c0_31, %c0_32] : memref<9x8x4xbf16, #tpu.memory_space<vmem>>, vector<1x8x4xbf16>
    %31 = vector.shape_cast %30 : vector<1x8x4xbf16> to vector<8x4xbf16>
    %cst_33 = arith.constant dense<0.000000e+00> : vector<8x384xf32>
    %32 = tpu.matmul %31, %29, %cst_33 {dimension_numbers = #tpu.dot_dimension_numbers<[1], [0], [0], [1], [0, 0, 1, 1], [], []>} : vector<8x4xbf16>, vector<4x384xbf16>, vector<8x384xf32> -> vector<8x384xf32>
    %33 = arith.addf %27, %32 : vector<8x384xf32>
    %c0_34 = arith.constant 0 : index
    %c0_35 = arith.constant 0 : index
    %c0_36 = arith.constant 0 : index
    %c20 = arith.constant 20 : index
    %34 = vector.load %arg3[%c0_34, %c0_35, %c0_36, %c20] : memref<1x1x4x422xbf16, #tpu.memory_space<vmem>>, vector<1x1x4x384xbf16>
    %35 = vector.shape_cast %34 : vector<1x1x4x384xbf16> to vector<4x384xbf16>
    %c5 = arith.constant 5 : index
    %c0_37 = arith.constant 0 : index
    %c0_38 = arith.constant 0 : index
    %36 = vector.load %arg4[%c5, %c0_37, %c0_38] : memref<9x8x4xbf16, #tpu.memory_space<vmem>>, vector<1x8x4xbf16>
    %37 = vector.shape_cast %36 : vector<1x8x4xbf16> to vector<8x4xbf16>
    %cst_39 = arith.constant dense<0.000000e+00> : vector<8x384xf32>
    %38 = tpu.matmul %37, %35, %cst_39 {dimension_numbers = #tpu.dot_dimension_numbers<[1], [0], [0], [1], [0, 0, 1, 1], [], []>} : vector<8x4xbf16>, vector<4x384xbf16>, vector<8x384xf32> -> vector<8x384xf32>
    %39 = arith.addf %33, %38 : vector<8x384xf32>
    %c0_40 = arith.constant 0 : index
    %c0_41 = arith.constant 0 : index
    %c0_42 = arith.constant 0 : index
    %c36 = arith.constant 36 : index
    %40 = vector.load %arg3[%c0_40, %c0_41, %c0_42, %c36] : memref<1x1x4x422xbf16, #tpu.memory_space<vmem>>, vector<1x1x4x384xbf16>
    %41 = vector.shape_cast %40 : vector<1x1x4x384xbf16> to vector<4x384xbf16>
    %c6 = arith.constant 6 : index
    %c0_43 = arith.constant 0 : index
    %c0_44 = arith.constant 0 : index
    %42 = vector.load %arg4[%c6, %c0_43, %c0_44] : memref<9x8x4xbf16, #tpu.memory_space<vmem>>, vector<1x8x4xbf16>
    %43 = vector.shape_cast %42 : vector<1x8x4xbf16> to vector<8x4xbf16>
    %cst_45 = arith.constant dense<0.000000e+00> : vector<8x384xf32>
    %44 = tpu.matmul %43, %41, %cst_45 {dimension_numbers = #tpu.dot_dimension_numbers<[1], [0], [0], [1], [0, 0, 1, 1], [], []>} : vector<8x4xbf16>, vector<4x384xbf16>, vector<8x384xf32> -> vector<8x384xf32>
    %45 = arith.addf %39, %44 : vector<8x384xf32>
    %c0_46 = arith.constant 0 : index
    %c0_47 = arith.constant 0 : index
    %c0_48 = arith.constant 0 : index
    %c37 = arith.constant 37 : index
    %46 = vector.load %arg3[%c0_46, %c0_47, %c0_48, %c37] : memref<1x1x4x422xbf16, #tpu.memory_space<vmem>>, vector<1x1x4x384xbf16>
    %47 = vector.shape_cast %46 : vector<1x1x4x384xbf16> to vector<4x384xbf16>
    %c7 = arith.constant 7 : index
    %c0_49 = arith.constant 0 : index
    %c0_50 = arith.constant 0 : index
    %48 = vector.load %arg4[%c7, %c0_49, %c0_50] : memref<9x8x4xbf16, #tpu.memory_space<vmem>>, vector<1x8x4xbf16>
    %49 = vector.shape_cast %48 : vector<1x8x4xbf16> to vector<8x4xbf16>
    %cst_51 = arith.constant dense<0.000000e+00> : vector<8x384xf32>
    %50 = tpu.matmul %49, %47, %cst_51 {dimension_numbers = #tpu.dot_dimension_numbers<[1], [0], [0], [1], [0, 0, 1, 1], [], []>} : vector<8x4xbf16>, vector<4x384xbf16>, vector<8x384xf32> -> vector<8x384xf32>
    %51 = arith.addf %45, %50 : vector<8x384xf32>
    %c0_52 = arith.constant 0 : index
    %c0_53 = arith.constant 0 : index
    %c0_54 = arith.constant 0 : index
    %c38 = arith.constant 38 : index
    %52 = vector.load %arg3[%c0_52, %c0_53, %c0_54, %c38] : memref<1x1x4x422xbf16, #tpu.memory_space<vmem>>, vector<1x1x4x384xbf16>
    %53 = vector.shape_cast %52 : vector<1x1x4x384xbf16> to vector<4x384xbf16>
    %c8 = arith.constant 8 : index
    %c0_55 = arith.constant 0 : index
    %c0_56 = arith.constant 0 : index
    %54 = vector.load %arg4[%c8, %c0_55, %c0_56] : memref<9x8x4xbf16, #tpu.memory_space<vmem>>, vector<1x8x4xbf16>
    %55 = vector.shape_cast %54 : vector<1x8x4xbf16> to vector<8x4xbf16>
    %cst_57 = arith.constant dense<0.000000e+00> : vector<8x384xf32>
    %56 = tpu.matmul %55, %53, %cst_57 {dimension_numbers = #tpu.dot_dimension_numbers<[1], [0], [0], [1], [0, 0, 1, 1], [], []>} : vector<8x4xbf16>, vector<4x384xbf16>, vector<8x384xf32> -> vector<8x384xf32>
    %57 = arith.addf %51, %56 : vector<8x384xf32>
    %c0_58 = arith.constant 0 : index
    %c0_59 = arith.constant 0 : index
    %58 = vector.load %arg8[%c0_58, %c0_59] : memref<8x384xf32, #tpu.memory_space<vmem>>, vector<8x384xf32>
    %59 = arith.addf %58, %57 : vector<8x384xf32>
    %c0_60 = arith.constant 0 : index
    %c0_61 = arith.constant 0 : index
    %60 = vector.load %arg8[%c0_60, %c0_61] : memref<8x384xf32, #tpu.memory_space<vmem>>, vector<8x384xf32>
    tpu.vector_store %arg8[%c0_60, %c0_61], %59 {strides = array<i32>} : memref<8x384xf32, #tpu.memory_space<vmem>>, vector<8x384xf32>,
    %c0_i32_62 = arith.constant 0 : i32
    %61 = arith.cmpi eq, %arg2, %c0_i32_62 : i32
    %62 = arith.extui %61 : i1 to i32
    %c0_i32_63 = arith.constant 0 : i32
    %63 = arith.cmpi ne, %62, %c0_i32_63 : i32
    scf.if %63 {
      %c0_64 = arith.constant 0 : index
      %c0_65 = arith.constant 0 : index
      %64 = vector.load %arg8[%c0_64, %c0_65] : memref<8x384xf32, #tpu.memory_space<vmem>>, vector<8x384xf32>
      %c0_66 = arith.constant 0 : index
      %c0_67 = arith.constant 0 : index
      %65 = vector.load %arg5[%c0_66, %c0_67] : memref<8x1xf32, #tpu.memory_space<vmem>>, vector<8x1xf32>
      %66 = vector.broadcast %65 : vector<8x1xf32> to vector<8x384xf32>
      %67 = arith.mulf %64, %66 : vector<8x384xf32>
      %c0_68 = arith.constant 0 : index
      %c0_69 = arith.constant 0 : index
      %68 = vector.load %arg6[%c0_68, %c0_69] : memref<8x1xf32, #tpu.memory_space<vmem>>, vector<8x1xf32>
      %69 = vector.broadcast %68 : vector<8x1xf32> to vector<8x384xf32>
      %70 = arith.addf %67, %69 : vector<8x384xf32>
      %cst_70 = arith.constant 2.000000e+01 : f32
      %71 = vector.broadcast %cst_70 : f32 to vector<8x384xf32>
      %72 = arith.minimumf %70, %71 : vector<8x384xf32>
      %73 = math.exp %72 : vector<8x384xf32>
      %cst_71 = arith.constant 2.000000e+00 : f32
      %74 = vector.broadcast %cst_71 : f32 to vector<8x384xf32>
      %75 = arith.addf %73, %74 : vector<8x384xf32>
      %76 = arith.mulf %73, %75 : vector<8x384xf32>
      %cst_72 = arith.constant 2.000000e+00 : f32
      %77 = vector.broadcast %cst_72 : f32 to vector<8x384xf32>
      %78 = arith.addf %76, %77 : vector<8x384xf32>
      %79 = tpu.reciprocal %78 {approx = true} : vector<8x384xf32> -> vector<8x384xf32>
      %80 = arith.mulf %76, %79 : vector<8x384xf32>
      %81 = arith.mulf %70, %80 : vector<8x384xf32>
      %c0_73 = arith.constant 0 : index
      %c0_74 = arith.constant 0 : index
      %c0_75 = arith.constant 0 : index
      %82 = vector.load %arg7[%c0_73, %c0_74, %c0_75] : memref<1x8x384xf32, #tpu.memory_space<vmem>>, vector<1x8x384xf32>
      %83 = vector.shape_cast %82 : vector<1x8x384xf32> to vector<8x384xf32>
      %84 = vector.shape_cast %81 : vector<8x384xf32> to vector<1x8x384xf32>
      tpu.vector_store %arg7[%c0_73, %c0_74, %c0_75], %84 {strides = array<i32>} : memref<1x8x384xf32, #tpu.memory_space<vmem>>, vector<1x8x384xf32>,
    } else {
    }
    return
  }
  func.func @transform_0(%arg0: i32, %arg1: i32, %arg2: i32) -> (i32, i32, i32, i32) {
    %c0_i32 = arith.constant 0 : i32
    %c0_i32_0 = arith.constant 0 : i32
    %c0_i32_1 = arith.constant 0 : i32
    return %arg0, %c0_i32, %arg2, %c0_i32_0 : i32, i32, i32, i32
  }
  func.func @transform_1(%arg0: i32, %arg1: i32, %arg2: i32) -> (i32, i32, i32) {
    %c0_i32 = arith.constant 0 : i32
    %c0_i32_0 = arith.constant 0 : i32
    return %c0_i32, %arg1, %arg2 : i32, i32, i32
  }
  func.func @transform_2(%arg0: i32, %arg1: i32, %arg2: i32) -> (i32, i32) {
    %c0_i32 = arith.constant 0 : i32
    %c0_i32_0 = arith.constant 0 : i32
    return %arg1, %c0_i32 : i32, i32
  }
  func.func @transform_3(%arg0: i32, %arg1: i32, %arg2: i32) -> (i32, i32) {
    %c0_i32 = arith.constant 0 : i32
    %c0_i32_0 = arith.constant 0 : i32
    return %arg1, %c0_i32 : i32, i32
  }
  func.func @transform_4(%arg0: i32, %arg1: i32, %arg2: i32) -> (i32, i32, i32) {
    %c0_i32 = arith.constant 0 : i32
    %c0_i32_0 = arith.constant 0 : i32
    return %arg0, %arg1, %c0_i32 : i32, i32, i32
  }
}

</mosaic_0001>

<llo_original>
// kernel: bn_conv_mish.1
$region0: #{bn_conv_mish.1}
  #allocation0 [shape = 'u32[]', space=smem, size = 0x4, offset = 0x4, fixed_abs, tag = 'smem constant byte address 0x4 - core index']
  #allocation1 [shape = 'u32[144,128]{1,0:T(1,128)}', space=vmem, size = 0x12000, scoped, tag = 'internal scratch']
  #allocation2 [shape = 'f32[8,384]{1,0:T(8,128)}', space=vmem, size = 0x3000, scoped, tag = 'scratch operand']
  %s0 = inlined_call_operand.vmem [shape: bf16[2,1,4,422], index: 0, kind: input, shape index: {}]
  %s1 = inlined_call_operand.vmem [shape: bf16[9,8,4], index: 1, kind: input, shape index: {}]
  %s2 = inlined_call_operand.vmem [shape: f32[8,1], index: 2, kind: input, shape index: {}]
  %s3 = inlined_call_operand.vmem [shape: f32[8,1], index: 3, kind: input, shape index: {}]
  %s4 = inlined_call_operand.vmem [shape: f32[2,8,384], index: 4, kind: output, shape index: {}]
  %s5 = sld [smem:[#allocation0]]
  $region57: #{bn_conv_mish.1} parent=0
    _
  %s7 = ssub.s32 1, %s5
  %s8 = scalar_select 0, %s7, %s5
  loop: start=0, step=1, limit=4
  $region2: #{bn_conv_mish.1} parent=0 // loop_pre_header
    _
  $region3: #{bn_conv_mish.1} parent=0 // loop_header
    %s10 = sphi 0, %s14
    %p11 = scmp.ge.s32.totalorder %s10, 4
    %s17 = sphi 0, %s36
    %s18 = sphi 0, %s32
    %s19 = sphi 0, %s28
    %s20 = sphi 0, %s17
    %s21 = sphi 0, %s18
    %s22 = sphi 0, %s19
    %s23 = sphi 0, %s20
    %s24 = sphi 0, %s21
    %s25 = sphi 0, %s22
    %s41 = sphi 0, %s43
    %s44 = sphi 0, %s41
    %s45 = sphi 0, %s44
    %s61 = sphi 0, %s45
    %s69 = sphi 0, %s71
    %s72 = sphi 0, %s69
    %s73 = sphi 0, %s72
    %s89 = sphi 0, %s73
    %s95 = sphi 0, %s97
    %s98 = sphi 0, %s95
    %s99 = sphi 0, %s98
    %s115 = sphi 0, %s99
    %s121 = sphi 0, %s123
    %s124 = sphi 0, %s121
    %s125 = sphi 0, %s124
    %s141 = sphi 0, %s125
    %s149 = sphi 0, %s151
    %s152 = sphi 0, %s149
    %s153 = sphi 0, %s152
    %s169 = sphi 0, %s153
  $region4: #{bn_conv_mish.1} parent=0 // loop_header_branch
    %13 = sbr.rel (%p11) target = $region8
  $region5: #{bn_conv_mish.1} parent=0 // loop_body
    %s15 = ssub.s32 %s10, 1
    %s16 = ssub.s32 %s10, 2
    %s26 = sadd.s32 1, %s19
    %p27 = scmp.ge.s32.totalorder %s26, 1
    %s28 = scalar_select %p27, 0, %s26
    %s29 = sadd.s32 1, %s18
    %s30 = scalar_select %p27, %s29, %s18
    %p31 = scmp.ge.s32.totalorder %s30, 1
    %s32 = scalar_select %p31, 0, %s30
    %s33 = sadd.s32 1, %s17
    %s34 = scalar_select %p31, %s33, %s17
    %p35 = scmp.ge.s32.totalorder %s34, 2
    %s36 = scalar_select %p35, 0, %s34
    %s37 = ssub.s32 %s17, %s36
    %s38 = ssub.s32 %s19, %s28
    %s39 = sor.u32 %s37, %s38
    %p40 = scmp.eq.s32.totalorder %s39, 0
    %s42 = sadd.s32 %s41, 1
    %s43 = scalar_select %p40, %s41, %s42
    %p46 = pneg %p40
    %p47 = scmp.eq.s32.totalorder %s10, 1
    %p48 = por %p46, %p47
    %p49 = scmp.ne.s32.totalorder %s41, %s44
    %p50 = scmp.eq.s32.totalorder %s10, 0
    %p51 = por %p49, %p50
    %p52 = scmp.ne.s32.totalorder %s41, %s44
    %p53 = scmp.eq.s32.totalorder %s15, 1
    %p54 = por %p52, %p53
    %p55 = scmp.ne.s32.totalorder %s44, %s45
    %p56 = scmp.eq.s32.totalorder %s15, 0
    %p57 = por %p55, %p56
    %p58 = scmp.ne.s32.totalorder %s44, %s45
    %p59 = scmp.eq.s32.totalorder %s16, 1
    %p60 = por %p58, %p59
    %p62 = scmp.ne.s32.totalorder %s45, %s61
    %p63 = scmp.eq.s32.totalorder %s16, 0
    %p64 = por %p62, %p63
    %s65 = ssub.s32 %s18, %s32
    %s66 = ssub.s32 %s19, %s28
    %s67 = sor.u32 %s65, %s66
    %p68 = scmp.eq.s32.totalorder %s67, 0
    %s70 = sadd.s32 %s69, 1
    %s71 = scalar_select %p68, %s69, %s70
    %p74 = pneg %p68
    %p75 = scmp.eq.s32.totalorder %s10, 1
    %p76 = por %p74, %p75
    %p77 = scmp.ne.s32.totalorder %s69, %s72
    %p78 = scmp.eq.s32.totalorder %s10, 0
    %p79 = por %p77, %p78
    %p80 = scmp.ne.s32.totalorder %s69, %s72
    %p81 = scmp.eq.s32.totalorder %s15, 1
    %p82 = por %p80, %p81
    %p83 = scmp.ne.s32.totalorder %s72, %s73
    %p84 = scmp.eq.s32.totalorder %s15, 0
    %p85 = por %p83, %p84
    %p86 = scmp.ne.s32.totalorder %s72, %s73
    %p87 = scmp.eq.s32.totalorder %s16, 1
    %p88 = por %p86, %p87
    %p90 = scmp.ne.s32.totalorder %s73, %s89
    %p91 = scmp.eq.s32.totalorder %s16, 0
    %p92 = por %p90, %p91
    %s93 = ssub.s32 %s18, %s32
    %p94 = scmp.eq.s32.totalorder %s93, 0
    %s96 = sadd.s32 %s95, 1
    %s97 = scalar_select %p94, %s95, %s96
    %p100 = pneg %p94
    %p101 = scmp.eq.s32.totalorder %s10, 1
    %p102 = por %p100, %p101
    %p103 = scmp.ne.s32.totalorder %s95, %s98
    %p104 = scmp.eq.s32.totalorder %s10, 0
    %p105 = por %p103, %p104
    %p106 = scmp.ne.s32.totalorder %s95, %s98
    %p107 = scmp.eq.s32.totalorder %s15, 1
    %p108 = por %p106, %p107
    %p109 = scmp.ne.s32.totalorder %s98, %s99
    %p110 = scmp.eq.s32.totalorder %s15, 0
    %p111 = por %p109, %p110
    %p112 = scmp.ne.s32.totalorder %s98, %s99
    %p113 = scmp.eq.s32.totalorder %s16, 1
    %p114 = por %p112, %p113
    %p116 = scmp.ne.s32.totalorder %s99, %s115
    %p117 = scmp.eq.s32.totalorder %s16, 0
    %p118 = por %p116, %p117
    %s119 = ssub.s32 %s18, %s32
    %p120 = scmp.eq.s32.totalorder %s119, 0
    %s122 = sadd.s32 %s121, 1
    %s123 = scalar_select %p120, %s121, %s122
    %p126 = pneg %p120
    %p127 = scmp.eq.s32.totalorder %s10, 1
    %p128 = por %p126, %p127
    %p129 = scmp.ne.s32.totalorder %s121, %s124
    %p130 = scmp.eq.s32.totalorder %s10, 0
    %p131 = por %p129, %p130
    %p132 = scmp.ne.s32.totalorder %s121, %s124
    %p133 = scmp.eq.s32.totalorder %s15, 1
    %p134 = por %p132, %p133
    %p135 = scmp.ne.s32.totalorder %s124, %s125
    %p136 = scmp.eq.s32.totalorder %s15, 0
    %p137 = por %p135, %p136
    %p138 = scmp.ne.s32.totalorder %s124, %s125
    %p139 = scmp.eq.s32.totalorder %s16, 1
    %p140 = por %p138, %p139
    %p142 = scmp.ne.s32.totalorder %s125, %s141
    %p143 = scmp.eq.s32.totalorder %s16, 0
    %p144 = por %p142, %p143
    %s145 = ssub.s32 %s17, %s36
    %s146 = ssub.s32 %s18, %s32
    %s147 = sor.u32 %s145, %s146
    %p148 = scmp.eq.s32.totalorder %s147, 0
    %s150 = sadd.s32 %s149, 1
    %s151 = scalar_select %p148, %s149, %s150
    %p154 = pneg %p148
    %p155 = scmp.eq.s32.totalorder %s10, 1
    %p156 = por %p154, %p155
    %p157 = scmp.ne.s32.totalorder %s149, %s152
    %p158 = scmp.eq.s32.totalorder %s10, 0
    %p159 = por %p157, %p158
    %p160 = scmp.ne.s32.totalorder %s149, %s152
    %p161 = scmp.eq.s32.totalorder %s15, 1
    %p162 = por %p160, %p161
    %p163 = scmp.ne.s32.totalorder %s152, %s153
    %p164 = scmp.eq.s32.totalorder %s15, 0
    %p165 = por %p163, %p164
    %p166 = scmp.ne.s32.totalorder %s152, %s153
    %p167 = scmp.eq.s32.totalorder %s16, 1
    %p168 = por %p166, %p167
    %p170 = scmp.ne.s32.totalorder %s153, %s169
    %p171 = scmp.eq.s32.totalorder %s16, 0
    %p172 = por %p170, %p171
    %p173 = scmp.le.s32.totalorder 1, %s10
    %p174 = scmp.lt.s32.totalorder %s10, 3
    %p175 = pnand %p173, %p174
    %p176 = pneg %p175
    // Predicated region
    $region9: #{bn_conv_mish.1} parent=5 // pred_check
      _
    $region10: #{bn_conv_mish.1} parent=5 // pred_check_branch
      %178 = sbr.rel (%p175) target = $region12
    $region11: #{bn_conv_mish.1} parent=5 // pred_region
      %s179 = ssub.s32 %s10, 1
      // Predicated region
      $region13: #{bn_conv_mish.1} parent=11 // pred_check
        %p180 = pneg %p85
      $region14: #{bn_conv_mish.1} parent=11 // pred_check_branch
        %182 = sbr.rel (%p180) target = $region16
      $region15: #{bn_conv_mish.1} parent=11 // pred_region
        %p183 = scmp.lt.s32.totalorder %s21, 0
        %s184 = scalar_select %p183, %s21, 0
        %p185 = scmp.lt.s32.totalorder %s22, 0
        %s186 = scalar_select %p185, %s22, 0
        %s187 = sadd.s32 %s186, %s184
        %s188 = smul.addr %s187, 4
        %s189 = scalar_lea.vmem %s1, %s188
      $region16: #{bn_conv_mish.1} parent=11 // pred_fallthru
        _
      // Predicated region
      $region17: #{bn_conv_mish.1} parent=11 // pred_check
        %p190 = pneg %p111
      $region18: #{bn_conv_mish.1} parent=11 // pred_check_branch
        %192 = sbr.rel (%p190) target = $region20
      $region19: #{bn_conv_mish.1} parent=11 // pred_region
        %p193 = scmp.lt.s32.totalorder %s21, 0
        %s194 = scalar_select %p193, %s21, 0
        %s195 = smul.addr %s194, 8
        %s196 = scalar_lea.vmem %s2, %s195
      $region20: #{bn_conv_mish.1} parent=11 // pred_fallthru
        _
      // Predicated region
      $region21: #{bn_conv_mish.1} parent=11 // pred_check
        %p197 = pneg %p137
      $region22: #{bn_conv_mish.1} parent=11 // pred_check_branch
        %199 = sbr.rel (%p197) target = $region24
      $region23: #{bn_conv_mish.1} parent=11 // pred_region
        %p200 = scmp.lt.s32.totalorder %s21, 0
        %s201 = scalar_select %p200, %s21, 0
        %s202 = smul.addr %s201, 8
        %s203 = scalar_lea.vmem %s3, %s202
      $region24: #{bn_conv_mish.1} parent=11 // pred_fallthru
        _
    $region12: #{bn_conv_mish.1} parent=5 // pred_fallthru
      _
    %p204 = scmp.lt.s32.totalorder %s10, 2
    // Predicated region
    $region25: #{bn_conv_mish.1} parent=5 // pred_check
      %p205 = pneg %p204
    $region26: #{bn_conv_mish.1} parent=5 // pred_check_branch
      %207 = sbr.rel (%p205) target = $region28
    $region27: #{bn_conv_mish.1} parent=5 // pred_region
      // Predicated region
      $region29: #{bn_conv_mish.1} parent=27 // pred_check
        %p208 = pneg %p51
      $region30: #{bn_conv_mish.1} parent=27 // pred_check_branch
        %210 = sbr.rel (%p208) target = $region32
      $region31: #{bn_conv_mish.1} parent=27 // pred_region
        %p211 = scmp.lt.s32.totalorder %s17, 1
        %s212 = scalar_select %p211, %s17, 1
        %p213 = scmp.lt.s32.totalorder %s19, 0
        %s214 = scalar_select %p213, %s19, 0
        %s215 = smul.addr %s214, 4
        %s216 = smul.addr %s212, 4
        %s217 = sadd.s32 %s215, %s216
        %s218 = smul.addr %s217, 2
        %s219 = scalar_lea.vmem %s0, %s218
      $region32: #{bn_conv_mish.1} parent=27 // pred_fallthru
        _
    $region28: #{bn_conv_mish.1} parent=5 // pred_fallthru
      _
    %p220 = scmp.le.s32.totalorder 1, %s10
    %p221 = scmp.lt.s32.totalorder %s10, 3
    %p222 = pnand %p220, %p221
    %p223 = pneg %p222
    // Predicated region
    $region33: #{bn_conv_mish.1} parent=5 // pred_check
      _
    $region34: #{bn_conv_mish.1} parent=5 // pred_check_branch
      %225 = sbr.rel (%p222) target = $region36
    $region35: #{bn_conv_mish.1} parent=5 // pred_region
      %s226 = ssub.s32 %s10, 1
      %p227 = scmp.lt.s32.totalorder %s20, 1
      %s228 = scalar_select %p227, %s20, 1
      %p229 = scmp.lt.s32.totalorder %s22, 0
      %s230 = scalar_select %p229, %s22, 0
      %s231 = smul.addr %s230, 4
      %s232 = smul.addr %s228, 4
      %s233 = sadd.s32 %s231, %s232
      %s234 = smul.addr %s233, 2
      %s235 = scalar_lea.vmem %s0, %s234
      %p236 = pneg %p57
      %p237 = pneg %p54
      %p238 = scmp.lt.s32.totalorder %s21, 0
      %s239 = scalar_select %p238, %s21, 0
      %p240 = scmp.lt.s32.totalorder %s22, 0
      %s241 = scalar_select %p240, %s22, 0
      %s242 = sadd.s32 %s241, %s239
      %s243 = smul.addr %s242, 4
      %s244 = scalar_lea.vmem %s1, %s243
      %p245 = pneg %p85
      %p246 = pneg %p82
      %p247 = scmp.lt.s32.totalorder %s21, 0
      %s248 = scalar_select %p247, %s21, 0
      %s249 = smul.addr %s248, 8
      %s250 = scalar_lea.vmem %s2, %s249
      %p251 = pneg %p111
      %p252 = pneg %p108
      %p253 = scmp.lt.s32.totalorder %s21, 0
      %s254 = scalar_select %p253, %s21, 0
      %s255 = smul.addr %s254, 8
      %s256 = scalar_lea.vmem %s3, %s255
      %p257 = pneg %p137
      %p258 = pneg %p134
      %p259 = pneg %p165
      %p260 = pneg %p162
      %p261 = scmp.lt.s32.totalorder %s20, 1
      %s262 = scalar_select %p261, %s20, 1
      %p263 = scmp.lt.s32.totalorder %s21, 0
      %s264 = scalar_select %p263, %s21, 0
      %s265 = smul.addr %s264, 3
      %s266 = smul.addr %s262, 3
      %s267 = sadd.s32 %s265, %s266
      %s268 = smul.addr %s267, 8
      %s269 = scalar_lea.vmem %s4, %s268
      %p270 = scmp.lt.s32.totalorder %s20, 1
      %s271 = scalar_select %p270, %s20, 1
      %p272 = scmp.lt.s32.totalorder %s22, 0
      %s273 = scalar_select %p272, %s22, 0
      %s274 = smul.addr %s273, 4
      %s275 = smul.addr %s271, 4
      %s276 = sadd.s32 %s274, %s275
      %s277 = smul.addr %s276, 2
      %s278 = scalar_lea.vmem %s0, %s277
      %p279 = scmp.lt.s32.totalorder %s21, 0
      %s280 = scalar_select %p279, %s21, 0
      %p281 = scmp.lt.s32.totalorder %s22, 0
      %s282 = scalar_select %p281, %s22, 0
      %s283 = sadd.s32 %s282, %s280
      %s284 = smul.addr %s283, 4
      %s285 = scalar_lea.vmem %s1, %s284
      %p286 = scmp.lt.s32.totalorder %s21, 0
      %s287 = scalar_select %p286, %s21, 0
      %s288 = smul.addr %s287, 8
      %s289 = scalar_lea.vmem %s2, %s288
      %p290 = scmp.lt.s32.totalorder %s21, 0
      %s291 = scalar_select %p290, %s21, 0
      %s292 = smul.addr %s291, 8
      %s293 = scalar_lea.vmem %s3, %s292
      %p294 = scmp.lt.s32.totalorder %s20, 1
      %s295 = scalar_select %p294, %s20, 1
      %p296 = scmp.lt.s32.totalorder %s21, 0
      %s297 = scalar_select %p296, %s21, 0
      %s298 = smul.addr %s297, 3
      %s299 = smul.addr %s295, 3
      %s300 = sadd.s32 %s298, %s299
      %s301 = smul.addr %s300, 8
      %s302 = scalar_lea.vmem %s4, %s301
      %p304 = scmp.eq.s32.totalorder %s22, 0
      // Predicated region
      $region37: #{bn_conv_mish.1} parent=35 // pred_check
        %p305 = pneg %p304
      $region38: #{bn_conv_mish.1} parent=35 // pred_check_branch
        %307 = sbr.rel (%p305) target = $region40
      $region39: #{bn_conv_mish.1} parent=35 // pred_region
        %308 = vst [vmem:[#allocation2] sm:$0xff] 0.0
        %309 = vst [vmem:[#allocation2 + $0x8] sm:$0xff] 0.0
        %310 = vst [vmem:[#allocation2 + $0x10] sm:$0xff] 0.0
      $region40: #{bn_conv_mish.1} parent=35 // pred_fallthru
        _
      %v311 = vld [vmem:[%s278] sm:$0x3f]
      %v312 = vld [vmem:[%s285] sm:$0xf]
      %v313 = vld [vmem:[%s278] sm:$0xff]
      %s314 = scalar_lea.vmem %s285, 4
      %v315 = vld [vmem:[%s314] sm:$0xf]
      %v317 = vcombine.high %v313, %v313
      %v319 = vunpack.c.l.s4 1983009808
      %v320 = vunpack.c.0.s8 %v319
      %v321 = vlaneseq
      %v322 = vshrl.u32 %v321, 7
      %v323 = vsub.s32 %v320, %v322
      %v324 = vrot.slane %v313, %v323
      %v326 = vunpack.c.l.s4 1983009808
      %v327 = vunpack.c.0.s8 %v326
      %v328 = vlaneseq
      %v329 = vshrl.u32 %v328, 7
      %v330 = vsub.s32 %v327, %v329
      %v331 = vrot.slane %v317, %v330
      %v332 = vcombine.high %v324, %v324
      %v333 = vcombine.high %v331, %v331
      %334 = vrot.lane.b32.xlu0 %v324, 127
      %v335 = vpop.permute.xlu0 %334
      %336 = vrot.lane.b32.xlu0 %v332, 127
      %v337 = vpop.permute.xlu0 %336
      %338 = vrot.lane.b32.xlu0 %v331, 127
      %v339 = vpop.permute.xlu0 %338
      %340 = vrot.lane.b32.xlu0 %v333, 127
      %v341 = vpop.permute.xlu0 %340
      %vm342 = vcmask 1039360
      %v343 = vsel %vm342, %v335, %v337
      %v344 = vsel %vm342, %v337, %v339
      %v345 = vsel %vm342, %v339, %v341
      %vm346 = vcmask 31744
      %v348 = vsel %vm346, %v315, 0
      %vm350 = vcmask 1041408
      %v352 = vsel %vm350, %v343, 0
      %v355 = vsel %vm350, %v344, 0
      %v358 = vsel %vm350, %v345, 0
      %360 = vmatprep.subr.bf16.mxu0 %v355
      %361 = vmatpush1.bf16.msra.mxu0 %v352
      %362 = vmatprep.subr.bf16.mxu0 0
      %363 = vmatpush1.bf16.msra.mxu0 0
      %364 = vmatprep.subr.bf16.mxu0 0
      %365 = vmatpush1.bf16.msra.mxu0 0
      %366 = vmatprep.subr.bf16.mxu0 0
      %367 = vmatpush1.bf16.msra.mxu0 0
      %368 = vmatprep.subr.bf16.mxu0 0
      %369 = vmatpush1.bf16.msra.mxu0 0
      %370 = vmatprep.subr.bf16.mxu0 0
      %371 = vmatpush1.bf16.msra.mxu0 0
      %372 = vmatprep.subr.bf16.mxu0 0
      %373 = vmatpush1.bf16.msra.mxu0 0
      %374 = vmatprep.subr.bf16.mxu0 0
      %375 = vmatpush1.bf16.msra.mxu0 0
      %376 = vmatprep.subr.bf16.mxu0 0
      %377 = vmatpush1.bf16.msra.mxu0 0
      %378 = vmatprep.subr.bf16.mxu0 0
      %379 = vmatpush1.bf16.msra.mxu0 0
      %380 = vmatprep.subr.bf16.mxu0 0
      %381 = vmatpush1.bf16.msra.mxu0 0
      %382 = vmatprep.subr.bf16.mxu0 0
      %383 = vmatpush1.bf16.msra.mxu0 0
      %384 = vmatprep.subr.bf16.mxu0 0
      %385 = vmatpush1.bf16.msra.mxu0 0
      %386 = vmatprep.subr.bf16.mxu0 0
      %387 = vmatpush1.bf16.msra.mxu0 0
      %388 = vmatprep.subr.bf16.mxu0 0
      %389 = vmatpush1.bf16.msra.mxu0 0
      %390 = vmatprep.subr.bf16.mxu0 0
      %391 = vmatpush1.bf16.msra.mxu0 0
      %392 = vmatprep.mubr.bf16.mxu0 0
      %393 = vmatmul.mubr.bf16.gmra.mrb[0].mxu0 %v348
      %v394 = vpop.f32.mrb[0].mxu0
      %v395 = vadd.f32 0.0, %v394
      %v396 = vpop.f32.mrb[0].mxu0
      %v397 = vadd.f32 0.0, %v396
      %v398 = vpop.f32.mrb[0].mxu0
      %v399 = vpop.f32.mrb[0].mxu0
      %400 = vdwg.mxu0
      %401 = vmatprep.subr.bf16.mxu0 0
      %402 = vmatpush1.bf16.msra.mxu0 %v358
      %403 = vmatprep.subr.bf16.mxu0 0
      %404 = vmatpush1.bf16.msra.mxu0 0
      %405 = vmatprep.subr.bf16.mxu0 0
      %406 = vmatpush1.bf16.msra.mxu0 0
      %407 = vmatprep.subr.bf16.mxu0 0
      %408 = vmatpush1.bf16.msra.mxu0 0
      %409 = vmatprep.subr.bf16.mxu0 0
      %410 = vmatpush1.bf16.msra.mxu0 0
      %411 = vmatprep.subr.bf16.mxu0 0
      %412 = vmatpush1.bf16.msra.mxu0 0
      %413 = vmatprep.subr.bf16.mxu0 0
      %414 = vmatpush1.bf16.msra.mxu0 0
      %415 = vmatprep.subr.bf16.mxu0 0
      %416 = vmatpush1.bf16.msra.mxu0 0
      %417 = vmatprep.subr.bf16.mxu0 0
      %418 = vmatpush1.bf16.msra.mxu0 0
      %419 = vmatprep.subr.bf16.mxu0 0
      %420 = vmatpush1.bf16.msra.mxu0 0
      %421 = vmatprep.subr.bf16.mxu0 0
      %422 = vmatpush1.bf16.msra.mxu0 0
      %423 = vmatprep.subr.bf16.mxu0 0
      %424 = vmatpush1.bf16.msra.mxu0 0
      %425 = vmatprep.subr.bf16.mxu0 0
      %426 = vmatpush1.bf16.msra.mxu0 0
      %427 = vmatprep.subr.bf16.mxu0 0
      %428 = vmatpush1.bf16.msra.mxu0 0
      %429 = vmatprep.subr.bf16.mxu0 0
      %430 = vmatpush1.bf16.msra.mxu0 0
      %431 = vmatprep.subr.bf16.mxu0 0
      %432 = vmatpush1.bf16.msra.mxu0 0
      %433 = vmatprep.mubr.bf16.mxu0 0
      %434 = vmatmul.mubr.bf16.gmra.mrb[0].mxu0 %v348
      %v435 = vpop.f32.mrb[0].mxu0
      %v436 = vadd.f32 0.0, %v435
      %v437 = vpop.f32.mrb[0].mxu0
      %v438 = vpop.f32.mrb[0].mxu0
      %v439 = vpop.f32.mrb[0].mxu0
      %440 = vdwg.mxu0
      %v442 = vcombine.high %v311, %v311
      %v444 = vunpack.c.l.s4 1983009808
      %v445 = vunpack.c.0.s8 %v444
      %v446 = vlaneseq
      %v447 = vshrl.u32 %v446, 7
      %v448 = vsub.s32 %v445, %v447
      %v449 = vrot.slane %v311, %v448
      %v451 = vunpack.c.l.s4 1983009808
      %v452 = vunpack.c.0.s8 %v451
      %v453 = vlaneseq
      %v454 = vshrl.u32 %v453, 7
      %v455 = vsub.s32 %v452, %v454
      %v456 = vrot.slane %v442, %v455
      %v457 = vcombine.high %v449, %v449
      %v459 = vsel %vm346, %v312, 0
      %v462 = vsel %vm350, %v449, 0
      %v465 = vsel %vm350, %v457, 0
      %v468 = vsel %vm350, %v456, 0
      %470 = vmatprep.subr.bf16.mxu0 %v465
      %471 = vmatpush1.bf16.msra.mxu0 %v462
      %472 = vmatprep.subr.bf16.mxu0 0
      %473 = vmatpush1.bf16.msra.mxu0 0
      %474 = vmatprep.subr.bf16.mxu0 0
      %475 = vmatpush1.bf16.msra.mxu0 0
      %476 = vmatprep.subr.bf16.mxu0 0
      %477 = vmatpush1.bf16.msra.mxu0 0
      %478 = vmatprep.subr.bf16.mxu0 0
      %479 = vmatpush1.bf16.msra.mxu0 0
      %480 = vmatprep.subr.bf16.mxu0 0
      %481 = vmatpush1.bf16.msra.mxu0 0
      %482 = vmatprep.subr.bf16.mxu0 0
      %483 = vmatpush1.bf16.msra.mxu0 0
      %484 = vmatprep.subr.bf16.mxu0 0
      %485 = vmatpush1.bf16.msra.mxu0 0
      %486 = vmatprep.subr.bf16.mxu0 0
      %487 = vmatpush1.bf16.msra.mxu0 0
      %488 = vmatprep.subr.bf16.mxu0 0
      %489 = vmatpush1.bf16.msra.mxu0 0
      %490 = vmatprep.subr.bf16.mxu0 0
      %491 = vmatpush1.bf16.msra.mxu0 0
      %492 = vmatprep.subr.bf16.mxu0 0
      %493 = vmatpush1.bf16.msra.mxu0 0
      %494 = vmatprep.subr.bf16.mxu0 0
      %495 = vmatpush1.bf16.msra.mxu0 0
      %496 = vmatprep.subr.bf16.mxu0 0
      %497 = vmatpush1.bf16.msra.mxu0 0
      %498 = vmatprep.subr.bf16.mxu0 0
      %499 = vmatpush1.bf16.msra.mxu0 0
      %500 = vmatprep.subr.bf16.mxu0 0
      %501 = vmatpush1.bf16.msra.mxu0 0
      %502 = vmatprep.mubr.bf16.mxu0 0
      %503 = vmatmul.mubr.bf16.gmra.mrb[0].mxu0 %v459
      %v504 = vpop.f32.mrb[0].mxu0
      %v505 = vadd.f32 %v395, %v504
      %v506 = vpop.f32.mrb[0].mxu0
      %v507 = vadd.f32 %v397, %v506
      %v508 = vpop.f32.mrb[0].mxu0
      %v509 = vpop.f32.mrb[0].mxu0
      %510 = vdwg.mxu0
      %511 = vmatprep.subr.bf16.mxu0 0
      %512 = vmatpush1.bf16.msra.mxu0 %v468
      %513 = vmatprep.subr.bf16.mxu0 0
      %514 = vmatpush1.bf16.msra.mxu0 0
      %515 = vmatprep.subr.bf16.mxu0 0
      %516 = vmatpush1.bf16.msra.mxu0 0
      %517 = vmatprep.subr.bf16.mxu0 0
      %518 = vmatpush1.bf16.msra.mxu0 0
      %519 = vmatprep.subr.bf16.mxu0 0
      %520 = vmatpush1.bf16.msra.mxu0 0
      %521 = vmatprep.subr.bf16.mxu0 0
      %522 = vmatpush1.bf16.msra.mxu0 0
      %523 = vmatprep.subr.bf16.mxu0 0
      %524 = vmatpush1.bf16.msra.mxu0 0
      %525 = vmatprep.subr.bf16.mxu0 0
      %526 = vmatpush1.bf16.msra.mxu0 0
      %527 = vmatprep.subr.bf16.mxu0 0
      %528 = vmatpush1.bf16.msra.mxu0 0
      %529 = vmatprep.subr.bf16.mxu0 0
      %530 = vmatpush1.bf16.msra.mxu0 0
      %531 = vmatprep.subr.bf16.mxu0 0
      %532 = vmatpush1.bf16.msra.mxu0 0
      %533 = vmatprep.subr.bf16.mxu0 0
      %534 = vmatpush1.bf16.msra.mxu0 0
      %535 = vmatprep.subr.bf16.mxu0 0
      %536 = vmatpush1.bf16.msra.mxu0 0
      %537 = vmatprep.subr.bf16.mxu0 0
      %538 = vmatpush1.bf16.msra.mxu0 0
      %539 = vmatprep.subr.bf16.mxu0 0
      %540 = vmatpush1.bf16.msra.mxu0 0
      %541 = vmatprep.subr.bf16.mxu0 0
      %542 = vmatpush1.bf16.msra.mxu0 0
      %543 = vmatprep.mubr.bf16.mxu0 0
      %544 = vmatmul.mubr.bf16.gmra.mrb[0].mxu0 %v459
      %v545 = vpop.f32.mrb[0].mxu0
      %v546 = vadd.f32 %v436, %v545
      %v547 = vpop.f32.mrb[0].mxu0
      %v548 = vpop.f32.mrb[0].mxu0
      %v549 = vpop.f32.mrb[0].mxu0
      %550 = vdwg.mxu0
      %v551 = vld [vmem:[%s278] sm:$0xff]
      %s552 = scalar_lea.vmem %s285, 8
      %v553 = vld [vmem:[%s552] sm:$0xf]
      %v555 = vcombine.high %v551, %v551
      %v557 = vunpack.c.l.s4 1983009808
      %v558 = vunpack.c.0.s8 %v557
      %v559 = vlaneseq
      %v560 = vshrl.u32 %v559, 7
      %v561 = vsub.s32 %v558, %v560
      %v562 = vrot.slane %v551, %v561
      %v564 = vunpack.c.l.s4 1983009808
      %v565 = vunpack.c.0.s8 %v564
      %v566 = vlaneseq
      %v567 = vshrl.u32 %v566, 7
      %v568 = vsub.s32 %v565, %v567
      %v569 = vrot.slane %v555, %v568
      %v570 = vcombine.high %v562, %v562
      %v571 = vcombine.high %v569, %v569
      %572 = vrot.lane.b32.xlu0 %v562, 126
      %v573 = vpop.permute.xlu0 %572
      %574 = vrot.lane.b32.xlu0 %v570, 126
      %v575 = vpop.permute.xlu0 %574
      %576 = vrot.lane.b32.xlu0 %v569, 126
      %v577 = vpop.permute.xlu0 %576
      %578 = vrot.lane.b32.xlu0 %v571, 126
      %v579 = vpop.permute.xlu0 %578
      %vm580 = vcmask 1031168
      %v581 = vsel %vm580, %v573, %v575
      %v582 = vsel %vm580, %v575, %v577
      %v583 = vsel %vm580, %v577, %v579
      %v585 = vsel %vm346, %v553, 0
      %v588 = vsel %vm350, %v581, 0
      %v591 = vsel %vm350, %v582, 0
      %v594 = vsel %vm350, %v583, 0
      %596 = vmatprep.subr.bf16.mxu0 %v591
      %597 = vmatpush1.bf16.msra.mxu0 %v588
      %598 = vmatprep.subr.bf16.mxu0 0
      %599 = vmatpush1.bf16.msra.mxu0 0
      %600 = vmatprep.subr.bf16.mxu0 0
      %601 = vmatpush1.bf16.msra.mxu0 0
      %602 = vmatprep.subr.bf16.mxu0 0
      %603 = vmatpush1.bf16.msra.mxu0 0
      %604 = vmatprep.subr.bf16.mxu0 0
      %605 = vmatpush1.bf16.msra.mxu0 0
      %606 = vmatprep.subr.bf16.mxu0 0
      %607 = vmatpush1.bf16.msra.mxu0 0
      %608 = vmatprep.subr.bf16.mxu0 0
      %609 = vmatpush1.bf16.msra.mxu0 0
      %610 = vmatprep.subr.bf16.mxu0 0
      %611 = vmatpush1.bf16.msra.mxu0 0
      %612 = vmatprep.subr.bf16.mxu0 0
      %613 = vmatpush1.bf16.msra.mxu0 0
      %614 = vmatprep.subr.bf16.mxu0 0
      %615 = vmatpush1.bf16.msra.mxu0 0
      %616 = vmatprep.subr.bf16.mxu0 0
      %617 = vmatpush1.bf16.msra.mxu0 0
      %618 = vmatprep.subr.bf16.mxu0 0
      %619 = vmatpush1.bf16.msra.mxu0 0
      %620 = vmatprep.subr.bf16.mxu0 0
      %621 = vmatpush1.bf16.msra.mxu0 0
      %622 = vmatprep.subr.bf16.mxu0 0
      %623 = vmatpush1.bf16.msra.mxu0 0
      %624 = vmatprep.subr.bf16.mxu0 0
      %625 = vmatpush1.bf16.msra.mxu0 0
      %626 = vmatprep.subr.bf16.mxu0 0
      %627 = vmatpush1.bf16.msra.mxu0 0
      %628 = vmatprep.mubr.bf16.mxu0 0
      %629 = vmatmul.mubr.bf16.gmra.mrb[0].mxu0 %v585
      %v630 = vpop.f32.mrb[0].mxu0
      %v631 = vadd.f32 0.0, %v630
      %v632 = vpop.f32.mrb[0].mxu0
      %v633 = vadd.f32 0.0, %v632
      %v634 = vpop.f32.mrb[0].mxu0
      %v635 = vpop.f32.mrb[0].mxu0
      %636 = vdwg.mxu0
      %637 = vmatprep.subr.bf16.mxu0 0
      %638 = vmatpush1.bf16.msra.mxu0 %v594
      %639 = vmatprep.subr.bf16.mxu0 0
      %640 = vmatpush1.bf16.msra.mxu0 0
      %641 = vmatprep.subr.bf16.mxu0 0
      %642 = vmatpush1.bf16.msra.mxu0 0
      %643 = vmatprep.subr.bf16.mxu0 0
      %644 = vmatpush1.bf16.msra.mxu0 0
      %645 = vmatprep.subr.bf16.mxu0 0
      %646 = vmatpush1.bf16.msra.mxu0 0
      %647 = vmatprep.subr.bf16.mxu0 0
      %648 = vmatpush1.bf16.msra.mxu0 0
      %649 = vmatprep.subr.bf16.mxu0 0
      %650 = vmatpush1.bf16.msra.mxu0 0
      %651 = vmatprep.subr.bf16.mxu0 0
      %652 = vmatpush1.bf16.msra.mxu0 0
      %653 = vmatprep.subr.bf16.mxu0 0
      %654 = vmatpush1.bf16.msra.mxu0 0
      %655 = vmatprep.subr.bf16.mxu0 0
      %656 = vmatpush1.bf16.msra.mxu0 0
      %657 = vmatprep.subr.bf16.mxu0 0
      %658 = vmatpush1.bf16.msra.mxu0 0
      %659 = vmatprep.subr.bf16.mxu0 0
      %660 = vmatpush1.bf16.msra.mxu0 0
      %661 = vmatprep.subr.bf16.mxu0 0
      %662 = vmatpush1.bf16.msra.mxu0 0
      %663 = vmatprep.subr.bf16.mxu0 0
      %664 = vmatpush1.bf16.msra.mxu0 0
      %665 = vmatprep.subr.bf16.mxu0 0
      %666 = vmatpush1.bf16.msra.mxu0 0
      %667 = vmatprep.subr.bf16.mxu0 0
      %668 = vmatpush1.bf16.msra.mxu0 0
      %669 = vmatprep.mubr.bf16.mxu0 0
      %670 = vmatmul.mubr.bf16.gmra.mrb[0].mxu0 %v585
      %v671 = vpop.f32.mrb[0].mxu0
      %v672 = vadd.f32 0.0, %v671
      %v673 = vpop.f32.mrb[0].mxu0
      %v674 = vpop.f32.mrb[0].mxu0
      %v675 = vpop.f32.mrb[0].mxu0
      %676 = vdwg.mxu0
      %v677 = vadd.f32 %v505, %v631
      %v678 = vadd.f32 %v507, %v633
      %v679 = vadd.f32 %v546, %v672
      %v680 = vld [vmem:[%s278] sm:$0xff]
      %s681 = scalar_lea.vmem %s285, 12
      %v682 = vld [vmem:[%s681] sm:$0xf]
      %v684 = vcombine.high %v680, %v680
      %v686 = vunpack.c.l.s4 1983009808
      %v687 = vunpack.c.0.s8 %v686
      %v688 = vlaneseq
      %v689 = vshrl.u32 %v688, 7
      %v690 = vsub.s32 %v687, %v689
      %v691 = vrot.slane %v680, %v690
      %v693 = vunpack.c.l.s4 1983009808
      %v694 = vunpack.c.0.s8 %v693
      %v695 = vlaneseq
      %v696 = vshrl.u32 %v695, 7
      %v697 = vsub.s32 %v694, %v696
      %v698 = vrot.slane %v684, %v697
      %v699 = vcombine.high %v691, %v691
      %v700 = vcombine.high %v698, %v698
      %701 = vrot.lane.b32.xlu0 %v691, 110
      %v702 = vpop.permute.xlu0 %701
      %703 = vrot.lane.b32.xlu0 %v699, 110
      %v704 = vpop.permute.xlu0 %703
      %705 = vrot.lane.b32.xlu0 %v698, 110
      %v706 = vpop.permute.xlu0 %705
      %707 = vrot.lane.b32.xlu0 %v700, 110
      %v708 = vpop.permute.xlu0 %707
      %vm709 = vcmask 900096
      %v710 = vsel %vm709, %v702, %v704
      %v711 = vsel %vm709, %v704, %v706
      %v712 = vsel %vm709, %v706, %v708
      %v714 = vsel %vm346, %v682, 0
      %v717 = vsel %vm350, %v710, 0
      %v720 = vsel %vm350, %v711, 0
      %v723 = vsel %vm350, %v712, 0
      %725 = vmatprep.subr.bf16.mxu0 %v720
      %726 = vmatpush1.bf16.msra.mxu0 %v717
      %727 = vmatprep.subr.bf16.mxu0 0
      %728 = vmatpush1.bf16.msra.mxu0 0
      %729 = vmatprep.subr.bf16.mxu0 0
      %730 = vmatpush1.bf16.msra.mxu0 0
      %731 = vmatprep.subr.bf16.mxu0 0
      %732 = vmatpush1.bf16.msra.mxu0 0
      %733 = vmatprep.subr.bf16.mxu0 0
      %734 = vmatpush1.bf16.msra.mxu0 0
      %735 = vmatprep.subr.bf16.mxu0 0
      %736 = vmatpush1.bf16.msra.mxu0 0
      %737 = vmatprep.subr.bf16.mxu0 0
      %738 = vmatpush1.bf16.msra.mxu0 0
      %739 = vmatprep.subr.bf16.mxu0 0
      %740 = vmatpush1.bf16.msra.mxu0 0
      %741 = vmatprep.subr.bf16.mxu0 0
      %742 = vmatpush1.bf16.msra.mxu0 0
      %743 = vmatprep.subr.bf16.mxu0 0
      %744 = vmatpush1.bf16.msra.mxu0 0
      %745 = vmatprep.subr.bf16.mxu0 0
      %746 = vmatpush1.bf16.msra.mxu0 0
      %747 = vmatprep.subr.bf16.mxu0 0
      %748 = vmatpush1.bf16.msra.mxu0 0
      %749 = vmatprep.subr.bf16.mxu0 0
      %750 = vmatpush1.bf16.msra.mxu0 0
      %751 = vmatprep.subr.bf16.mxu0 0
      %752 = vmatpush1.bf16.msra.mxu0 0
      %753 = vmatprep.subr.bf16.mxu0 0
      %754 = vmatpush1.bf16.msra.mxu0 0
      %755 = vmatprep.subr.bf16.mxu0 0
      %756 = vmatpush1.bf16.msra.mxu0 0
      %757 = vmatprep.mubr.bf16.mxu0 0
      %758 = vmatmul.mubr.bf16.gmra.mrb[0].mxu0 %v714
      %v759 = vpop.f32.mrb[0].mxu0
      %v760 = vadd.f32 0.0, %v759
      %v761 = vpop.f32.mrb[0].mxu0
      %v762 = vadd.f32 0.0, %v761
      %v763 = vpop.f32.mrb[0].mxu0
      %v764 = vpop.f32.mrb[0].mxu0
      %765 = vdwg.mxu0
      %766 = vmatprep.subr.bf16.mxu0 0
      %767 = vmatpush1.bf16.msra.mxu0 %v723
      %768 = vmatprep.subr.bf16.mxu0 0
      %769 = vmatpush1.bf16.msra.mxu0 0
      %770 = vmatprep.subr.bf16.mxu0 0
      %771 = vmatpush1.bf16.msra.mxu0 0
      %772 = vmatprep.subr.bf16.mxu0 0
      %773 = vmatpush1.bf16.msra.mxu0 0
      %774 = vmatprep.subr.bf16.mxu0 0
      %775 = vmatpush1.bf16.msra.mxu0 0
      %776 = vmatprep.subr.bf16.mxu0 0
      %777 = vmatpush1.bf16.msra.mxu0 0
      %778 = vmatprep.subr.bf16.mxu0 0
      %779 = vmatpush1.bf16.msra.mxu0 0
      %780 = vmatprep.subr.bf16.mxu0 0
      %781 = vmatpush1.bf16.msra.mxu0 0
      %782 = vmatprep.subr.bf16.mxu0 0
      %783 = vmatpush1.bf16.msra.mxu0 0
      %784 = vmatprep.subr.bf16.mxu0 0
      %785 = vmatpush1.bf16.msra.mxu0 0
      %786 = vmatprep.subr.bf16.mxu0 0
      %787 = vmatpush1.bf16.msra.mxu0 0
      %788 = vmatprep.subr.bf16.mxu0 0
      %789 = vmatpush1.bf16.msra.mxu0 0
      %790 = vmatprep.subr.bf16.mxu0 0
      %791 = vmatpush1.bf16.msra.mxu0 0
      %792 = vmatprep.subr.bf16.mxu0 0
      %793 = vmatpush1.bf16.msra.mxu0 0
      %794 = vmatprep.subr.bf16.mxu0 0
      %795 = vmatpush1.bf16.msra.mxu0 0
      %796 = vmatprep.subr.bf16.mxu0 0
      %797 = vmatpush1.bf16.msra.mxu0 0
      %798 = vmatprep.mubr.bf16.mxu0 0
      %799 = vmatmul.mubr.bf16.gmra.mrb[0].mxu0 %v714
      %v800 = vpop.f32.mrb[0].mxu0
      %v801 = vadd.f32 0.0, %v800
      %v802 = vpop.f32.mrb[0].mxu0
      %v803 = vpop.f32.mrb[0].mxu0
      %v804 = vpop.f32.mrb[0].mxu0
      %805 = vdwg.mxu0
      %v806 = vadd.f32 %v677, %v760
      %v807 = vadd.f32 %v678, %v762
      %v808 = vadd.f32 %v679, %v801
      %v809 = vld [vmem:[%s278] sm:$0xff]
      %s810 = scalar_lea.vmem %s285, 16
      %v811 = vld [vmem:[%s810] sm:$0xf]
      %v813 = vcombine.high %v809, %v809
      %v815 = vunpack.c.l.s4 1983009808
      %v816 = vunpack.c.0.s8 %v815
      %v817 = vlaneseq
      %v818 = vshrl.u32 %v817, 7
      %v819 = vsub.s32 %v816, %v818
      %v820 = vrot.slane %v809, %v819
      %v822 = vunpack.c.l.s4 1983009808
      %v823 = vunpack.c.0.s8 %v822
      %v824 = vlaneseq
      %v825 = vshrl.u32 %v824, 7
      %v826 = vsub.s32 %v823, %v825
      %v827 = vrot.slane %v813, %v826
      %v828 = vcombine.high %v820, %v820
      %v829 = vcombine.high %v827, %v827
      %830 = vrot.lane.b32.xlu0 %v820, 109
      %v831 = vpop.permute.xlu0 %830
      %832 = vrot.lane.b32.xlu0 %v828, 109
      %v833 = vpop.permute.xlu0 %832
      %834 = vrot.lane.b32.xlu0 %v827, 109
      %v835 = vpop.permute.xlu0 %834
      %836 = vrot.lane.b32.xlu0 %v829, 109
      %v837 = vpop.permute.xlu0 %836
      %vm838 = vcmask 891904
      %v839 = vsel %vm838, %v831, %v833
      %v840 = vsel %vm838, %v833, %v835
      %v841 = vsel %vm838, %v835, %v837
      %v843 = vsel %vm346, %v811, 0
      %v846 = vsel %vm350, %v839, 0
      %v849 = vsel %vm350, %v840, 0
      %v852 = vsel %vm350, %v841, 0
      %854 = vmatprep.subr.bf16.mxu0 %v849
      %855 = vmatpush1.bf16.msra.mxu0 %v846
      %856 = vmatprep.subr.bf16.mxu0 0
      %857 = vmatpush1.bf16.msra.mxu0 0
      %858 = vmatprep.subr.bf16.mxu0 0
      %859 = vmatpush1.bf16.msra.mxu0 0
      %860 = vmatprep.subr.bf16.mxu0 0
      %861 = vmatpush1.bf16.msra.mxu0 0
      %862 = vmatprep.subr.bf16.mxu0 0
      %863 = vmatpush1.bf16.msra.mxu0 0
      %864 = vmatprep.subr.bf16.mxu0 0
      %865 = vmatpush1.bf16.msra.mxu0 0
      %866 = vmatprep.subr.bf16.mxu0 0
      %867 = vmatpush1.bf16.msra.mxu0 0
      %868 = vmatprep.subr.bf16.mxu0 0
      %869 = vmatpush1.bf16.msra.mxu0 0
      %870 = vmatprep.subr.bf16.mxu0 0
      %871 = vmatpush1.bf16.msra.mxu0 0
      %872 = vmatprep.subr.bf16.mxu0 0
      %873 = vmatpush1.bf16.msra.mxu0 0
      %874 = vmatprep.subr.bf16.mxu0 0
      %875 = vmatpush1.bf16.msra.mxu0 0
      %876 = vmatprep.subr.bf16.mxu0 0
      %877 = vmatpush1.bf16.msra.mxu0 0
      %878 = vmatprep.subr.bf16.mxu0 0
      %879 = vmatpush1.bf16.msra.mxu0 0
      %880 = vmatprep.subr.bf16.mxu0 0
      %881 = vmatpush1.bf16.msra.mxu0 0
      %882 = vmatprep.subr.bf16.mxu0 0
      %883 = vmatpush1.bf16.msra.mxu0 0
      %884 = vmatprep.subr.bf16.mxu0 0
      %885 = vmatpush1.bf16.msra.mxu0 0
      %886 = vmatprep.mubr.bf16.mxu0 0
      %887 = vmatmul.mubr.bf16.gmra.mrb[0].mxu0 %v843
      %v888 = vpop.f32.mrb[0].mxu0
      %v889 = vadd.f32 0.0, %v888
      %v890 = vpop.f32.mrb[0].mxu0
      %v891 = vadd.f32 0.0, %v890
      %v892 = vpop.f32.mrb[0].mxu0
      %v893 = vpop.f32.mrb[0].mxu0
      %894 = vdwg.mxu0
      %895 = vmatprep.subr.bf16.mxu0 0
      %896 = vmatpush1.bf16.msra.mxu0 %v852
      %897 = vmatprep.subr.bf16.mxu0 0
      %898 = vmatpush1.bf16.msra.mxu0 0
      %899 = vmatprep.subr.bf16.mxu0 0
      %900 = vmatpush1.bf16.msra.mxu0 0
      %901 = vmatprep.subr.bf16.mxu0 0
      %902 = vmatpush1.bf16.msra.mxu0 0
      %903 = vmatprep.subr.bf16.mxu0 0
      %904 = vmatpush1.bf16.msra.mxu0 0
      %905 = vmatprep.subr.bf16.mxu0 0
      %906 = vmatpush1.bf16.msra.mxu0 0
      %907 = vmatprep.subr.bf16.mxu0 0
      %908 = vmatpush1.bf16.msra.mxu0 0
      %909 = vmatprep.subr.bf16.mxu0 0
      %910 = vmatpush1.bf16.msra.mxu0 0
      %911 = vmatprep.subr.bf16.mxu0 0
      %912 = vmatpush1.bf16.msra.mxu0 0
      %913 = vmatprep.subr.bf16.mxu0 0
      %914 = vmatpush1.bf16.msra.mxu0 0
      %915 = vmatprep.subr.bf16.mxu0 0
      %916 = vmatpush1.bf16.msra.mxu0 0
      %917 = vmatprep.subr.bf16.mxu0 0
      %918 = vmatpush1.bf16.msra.mxu0 0
      %919 = vmatprep.subr.bf16.mxu0 0
      %920 = vmatpush1.bf16.msra.mxu0 0
      %921 = vmatprep.subr.bf16.mxu0 0
      %922 = vmatpush1.bf16.msra.mxu0 0
      %923 = vmatprep.subr.bf16.mxu0 0
      %924 = vmatpush1.bf16.msra.mxu0 0
      %925 = vmatprep.subr.bf16.mxu0 0
      %926 = vmatpush1.bf16.msra.mxu0 0
      %927 = vmatprep.mubr.bf16.mxu0 0
      %928 = vmatmul.mubr.bf16.gmra.mrb[0].mxu0 %v843
      %v929 = vpop.f32.mrb[0].mxu0
      %v930 = vadd.f32 0.0, %v929
      %v931 = vpop.f32.mrb[0].mxu0
      %v932 = vpop.f32.mrb[0].mxu0
      %v933 = vpop.f32.mrb[0].mxu0
      %934 = vdwg.mxu0
      %v935 = vadd.f32 %v806, %v889
      %v936 = vadd.f32 %v807, %v891
      %v937 = vadd.f32 %v808, %v930
      %v938 = vld [vmem:[%s278] sm:$0xff]
      %s939 = scalar_lea.vmem %s285, 20
      %v940 = vld [vmem:[%s939] sm:$0xf]
      %v942 = vcombine.high %v938, %v938
      %v944 = vunpack.c.l.s4 1983009808
      %v945 = vunpack.c.0.s8 %v944
      %v946 = vlaneseq
      %v947 = vshrl.u32 %v946, 7
      %v948 = vsub.s32 %v945, %v947
      %v949 = vrot.slane %v938, %v948
      %v951 = vunpack.c.l.s4 1983009808
      %v952 = vunpack.c.0.s8 %v951
      %v953 = vlaneseq
      %v954 = vshrl.u32 %v953, 7
      %v955 = vsub.s32 %v952, %v954
      %v956 = vrot.slane %v942, %v955
      %v957 = vcombine.high %v949, %v949
      %v958 = vcombine.high %v956, %v956
      %959 = vrot.lane.b32.xlu0 %v949, 108
      %v960 = vpop.permute.xlu0 %959
      %961 = vrot.lane.b32.xlu0 %v957, 108
      %v962 = vpop.permute.xlu0 %961
      %963 = vrot.lane.b32.xlu0 %v956, 108
      %v964 = vpop.permute.xlu0 %963
      %965 = vrot.lane.b32.xlu0 %v958, 108
      %v966 = vpop.permute.xlu0 %965
      %vm967 = vcmask 883712
      %v968 = vsel %vm967, %v960, %v962
      %v969 = vsel %vm967, %v962, %v964
      %v970 = vsel %vm967, %v964, %v966
      %v972 = vsel %vm346, %v940, 0
      %v975 = vsel %vm350, %v968, 0
      %v978 = vsel %vm350, %v969, 0
      %v981 = vsel %vm350, %v970, 0
      %983 = vmatprep.subr.bf16.mxu0 %v978
      %984 = vmatpush1.bf16.msra.mxu0 %v975
      %985 = vmatprep.subr.bf16.mxu0 0
      %986 = vmatpush1.bf16.msra.mxu0 0
      %987 = vmatprep.subr.bf16.mxu0 0
      %988 = vmatpush1.bf16.msra.mxu0 0
      %989 = vmatprep.subr.bf16.mxu0 0
      %990 = vmatpush1.bf16.msra.mxu0 0
      %991 = vmatprep.subr.bf16.mxu0 0
      %992 = vmatpush1.bf16.msra.mxu0 0
      %993 = vmatprep.subr.bf16.mxu0 0
      %994 = vmatpush1.bf16.msra.mxu0 0
      %995 = vmatprep.subr.bf16.mxu0 0
      %996 = vmatpush1.bf16.msra.mxu0 0
      %997 = vmatprep.subr.bf16.mxu0 0
      %998 = vmatpush1.bf16.msra.mxu0 0
      %999 = vmatprep.subr.bf16.mxu0 0
      %1000 = vmatpush1.bf16.msra.mxu0 0
      %1001 = vmatprep.subr.bf16.mxu0 0
      %1002 = vmatpush1.bf16.msra.mxu0 0
      %1003 = vmatprep.subr.bf16.mxu0 0
      %1004 = vmatpush1.bf16.msra.mxu0 0
      %1005 = vmatprep.subr.bf16.mxu0 0
      %1006 = vmatpush1.bf16.msra.mxu0 0
      %1007 = vmatprep.subr.bf16.mxu0 0
      %1008 = vmatpush1.bf16.msra.mxu0 0
      %1009 = vmatprep.subr.bf16.mxu0 0
      %1010 = vmatpush1.bf16.msra.mxu0 0
      %1011 = vmatprep.subr.bf16.mxu0 0
      %1012 = vmatpush1.bf16.msra.mxu0 0
      %1013 = vmatprep.subr.bf16.mxu0 0
      %1014 = vmatpush1.bf16.msra.mxu0 0
      %1015 = vmatprep.mubr.bf16.mxu0 0
      %1016 = vmatmul.mubr.bf16.gmra.mrb[0].mxu0 %v972
      %v1017 = vpop.f32.mrb[0].mxu0
      %v1018 = vadd.f32 0.0, %v1017
      %v1019 = vpop.f32.mrb[0].mxu0
      %v1020 = vadd.f32 0.0, %v1019
      %v1021 = vpop.f32.mrb[0].mxu0
      %v1022 = vpop.f32.mrb[0].mxu0
      %1023 = vdwg.mxu0
      %1024 = vmatprep.subr.bf16.mxu0 0
      %1025 = vmatpush1.bf16.msra.mxu0 %v981
      %1026 = vmatprep.subr.bf16.mxu0 0
      %1027 = vmatpush1.bf16.msra.mxu0 0
      %1028 = vmatprep.subr.bf16.mxu0 0
      %1029 = vmatpush1.bf16.msra.mxu0 0
      %1030 = vmatprep.subr.bf16.mxu0 0
      %1031 = vmatpush1.bf16.msra.mxu0 0
      %1032 = vmatprep.subr.bf16.mxu0 0
      %1033 = vmatpush1.bf16.msra.mxu0 0
      %1034 = vmatprep.subr.bf16.mxu0 0
      %1035 = vmatpush1.bf16.msra.mxu0 0
      %1036 = vmatprep.subr.bf16.mxu0 0
      %1037 = vmatpush1.bf16.msra.mxu0 0
      %1038 = vmatprep.subr.bf16.mxu0 0
      %1039 = vmatpush1.bf16.msra.mxu0 0
      %1040 = vmatprep.subr.bf16.mxu0 0
      %1041 = vmatpush1.bf16.msra.mxu0 0
      %1042 = vmatprep.subr.bf16.mxu0 0
      %1043 = vmatpush1.bf16.msra.mxu0 0
      %1044 = vmatprep.subr.bf16.mxu0 0
      %1045 = vmatpush1.bf16.msra.mxu0 0
      %1046 = vmatprep.subr.bf16.mxu0 0
      %1047 = vmatpush1.bf16.msra.mxu0 0
      %1048 = vmatprep.subr.bf16.mxu0 0
      %1049 = vmatpush1.bf16.msra.mxu0 0
      %1050 = vmatprep.subr.bf16.mxu0 0
      %1051 = vmatpush1.bf16.msra.mxu0 0
      %1052 = vmatprep.subr.bf16.mxu0 0
      %1053 = vmatpush1.bf16.msra.mxu0 0
      %1054 = vmatprep.subr.bf16.mxu0 0
      %1055 = vmatpush1.bf16.msra.mxu0 0
      %1056 = vmatprep.mubr.bf16.mxu0 0
      %1057 = vmatmul.mubr.bf16.gmra.mrb[0].mxu0 %v972
      %v1058 = vpop.f32.mrb[0].mxu0
      %v1059 = vadd.f32 0.0, %v1058
      %v1060 = vpop.f32.mrb[0].mxu0
      %v1061 = vpop.f32.mrb[0].mxu0
      %v1062 = vpop.f32.mrb[0].mxu0
      %1063 = vdwg.mxu0
      %v1064 = vadd.f32 %v935, %v1018
      %v1065 = vadd.f32 %v936, %v1020
      %v1066 = vadd.f32 %v937, %v1059
      %v1067 = vld [vmem:[%s278] sm:$0xff]
      %s1068 = scalar_lea.vmem %s285, 24
      %v1069 = vld [vmem:[%s1068] sm:$0xf]
      %v1071 = vcombine.high %v1067, %v1067
      %v1073 = vunpack.c.l.s4 1983009808
      %v1074 = vunpack.c.0.s8 %v1073
      %v1075 = vlaneseq
      %v1076 = vshrl.u32 %v1075, 7
      %v1077 = vsub.s32 %v1074, %v1076
      %v1078 = vrot.slane %v1067, %v1077
      %v1080 = vunpack.c.l.s4 1983009808
      %v1081 = vunpack.c.0.s8 %v1080
      %v1082 = vlaneseq
      %v1083 = vshrl.u32 %v1082, 7
      %v1084 = vsub.s32 %v1081, %v1083
      %v1085 = vrot.slane %v1071, %v1084
      %v1086 = vcombine.high %v1078, %v1078
      %v1087 = vcombine.high %v1085, %v1085
      %1088 = vrot.lane.b32.xlu0 %v1078, 92
      %v1089 = vpop.permute.xlu0 %1088
      %1090 = vrot.lane.b32.xlu0 %v1086, 92
      %v1091 = vpop.permute.xlu0 %1090
      %1092 = vrot.lane.b32.xlu0 %v1085, 92
      %v1093 = vpop.permute.xlu0 %1092
      %1094 = vrot.lane.b32.xlu0 %v1087, 92
      %v1095 = vpop.permute.xlu0 %1094
      %vm1096 = vcmask 752640
      %v1097 = vsel %vm1096, %v1089, %v1091
      %v1098 = vsel %vm1096, %v1091, %v1093
      %v1099 = vsel %vm1096, %v1093, %v1095
      %v1101 = vsel %vm346, %v1069, 0
      %v1104 = vsel %vm350, %v1097, 0
      %v1107 = vsel %vm350, %v1098, 0
      %v1110 = vsel %vm350, %v1099, 0
      %1112 = vmatprep.subr.bf16.mxu0 %v1107
      %1113 = vmatpush1.bf16.msra.mxu0 %v1104
      %1114 = vmatprep.subr.bf16.mxu0 0
      %1115 = vmatpush1.bf16.msra.mxu0 0
      %1116 = vmatprep.subr.bf16.mxu0 0
      %1117 = vmatpush1.bf16.msra.mxu0 0
      %1118 = vmatprep.subr.bf16.mxu0 0
      %1119 = vmatpush1.bf16.msra.mxu0 0
      %1120 = vmatprep.subr.bf16.mxu0 0
      %1121 = vmatpush1.bf16.msra.mxu0 0
      %1122 = vmatprep.subr.bf16.mxu0 0
      %1123 = vmatpush1.bf16.msra.mxu0 0
      %1124 = vmatprep.subr.bf16.mxu0 0
      %1125 = vmatpush1.bf16.msra.mxu0 0
      %1126 = vmatprep.subr.bf16.mxu0 0
      %1127 = vmatpush1.bf16.msra.mxu0 0
      %1128 = vmatprep.subr.bf16.mxu0 0
      %1129 = vmatpush1.bf16.msra.mxu0 0
      %1130 = vmatprep.subr.bf16.mxu0 0
      %1131 = vmatpush1.bf16.msra.mxu0 0
      %1132 = vmatprep.subr.bf16.mxu0 0
      %1133 = vmatpush1.bf16.msra.mxu0 0
      %1134 = vmatprep.subr.bf16.mxu0 0
      %1135 = vmatpush1.bf16.msra.mxu0 0
      %1136 = vmatprep.subr.bf16.mxu0 0
      %1137 = vmatpush1.bf16.msra.mxu0 0
      %1138 = vmatprep.subr.bf16.mxu0 0
      %1139 = vmatpush1.bf16.msra.mxu0 0
      %1140 = vmatprep.subr.bf16.mxu0 0
      %1141 = vmatpush1.bf16.msra.mxu0 0
      %1142 = vmatprep.subr.bf16.mxu0 0
      %1143 = vmatpush1.bf16.msra.mxu0 0
      %1144 = vmatprep.mubr.bf16.mxu0 0
      %1145 = vmatmul.mubr.bf16.gmra.mrb[0].mxu0 %v1101
      %v1146 = vpop.f32.mrb[0].mxu0
      %v1147 = vadd.f32 0.0, %v1146
      %v1148 = vpop.f32.mrb[0].mxu0
      %v1149 = vadd.f32 0.0, %v1148
      %v1150 = vpop.f32.mrb[0].mxu0
      %v1151 = vpop.f32.mrb[0].mxu0
      %1152 = vdwg.mxu0
      %1153 = vmatprep.subr.bf16.mxu0 0
      %1154 = vmatpush1.bf16.msra.mxu0 %v1110
      %1155 = vmatprep.subr.bf16.mxu0 0
      %1156 = vmatpush1.bf16.msra.mxu0 0
      %1157 = vmatprep.subr.bf16.mxu0 0
      %1158 = vmatpush1.bf16.msra.mxu0 0
      %1159 = vmatprep.subr.bf16.mxu0 0
      %1160 = vmatpush1.bf16.msra.mxu0 0
      %1161 = vmatprep.subr.bf16.mxu0 0
      %1162 = vmatpush1.bf16.msra.mxu0 0
      %1163 = vmatprep.subr.bf16.mxu0 0
      %1164 = vmatpush1.bf16.msra.mxu0 0
      %1165 = vmatprep.subr.bf16.mxu0 0
      %1166 = vmatpush1.bf16.msra.mxu0 0
      %1167 = vmatprep.subr.bf16.mxu0 0
      %1168 = vmatpush1.bf16.msra.mxu0 0
      %1169 = vmatprep.subr.bf16.mxu0 0
      %1170 = vmatpush1.bf16.msra.mxu0 0
      %1171 = vmatprep.subr.bf16.mxu0 0
      %1172 = vmatpush1.bf16.msra.mxu0 0
      %1173 = vmatprep.subr.bf16.mxu0 0
      %1174 = vmatpush1.bf16.msra.mxu0 0
      %1175 = vmatprep.subr.bf16.mxu0 0
      %1176 = vmatpush1.bf16.msra.mxu0 0
      %1177 = vmatprep.subr.bf16.mxu0 0
      %1178 = vmatpush1.bf16.msra.mxu0 0
      %1179 = vmatprep.subr.bf16.mxu0 0
      %1180 = vmatpush1.bf16.msra.mxu0 0
      %1181 = vmatprep.subr.bf16.mxu0 0
      %1182 = vmatpush1.bf16.msra.mxu0 0
      %1183 = vmatprep.subr.bf16.mxu0 0
      %1184 = vmatpush1.bf16.msra.mxu0 0
      %1185 = vmatprep.mubr.bf16.mxu0 0
      %1186 = vmatmul.mubr.bf16.gmra.mrb[0].mxu0 %v1101
      %v1187 = vpop.f32.mrb[0].mxu0
      %v1188 = vadd.f32 0.0, %v1187
      %v1189 = vpop.f32.mrb[0].mxu0
      %v1190 = vpop.f32.mrb[0].mxu0
      %v1191 = vpop.f32.mrb[0].mxu0
      %1192 = vdwg.mxu0
      %v1193 = vadd.f32 %v1064, %v1147
      %v1194 = vadd.f32 %v1065, %v1149
      %v1195 = vadd.f32 %v1066, %v1188
      %v1196 = vld [vmem:[%s278] sm:$0xff]
      %s1197 = scalar_lea.vmem %s285, 28
      %v1198 = vld [vmem:[%s1197] sm:$0xf]
      %v1200 = vcombine.high %v1196, %v1196
      %v1202 = vunpack.c.l.s4 1983009808
      %v1203 = vunpack.c.0.s8 %v1202
      %v1204 = vlaneseq
      %v1205 = vshrl.u32 %v1204, 7
      %v1206 = vsub.s32 %v1203, %v1205
      %v1207 = vrot.slane %v1196, %v1206
      %v1209 = vunpack.c.l.s4 1983009808
      %v1210 = vunpack.c.0.s8 %v1209
      %v1211 = vlaneseq
      %v1212 = vshrl.u32 %v1211, 7
      %v1213 = vsub.s32 %v1210, %v1212
      %v1214 = vrot.slane %v1200, %v1213
      %v1215 = vcombine.high %v1207, %v1207
      %v1216 = vcombine.high %v1214, %v1214
      %1217 = vrot.lane.b32.xlu0 %v1207, 91
      %v1218 = vpop.permute.xlu0 %1217
      %1219 = vrot.lane.b32.xlu0 %v1215, 91
      %v1220 = vpop.permute.xlu0 %1219
      %1221 = vrot.lane.b32.xlu0 %v1214, 91
      %v1222 = vpop.permute.xlu0 %1221
      %1223 = vrot.lane.b32.xlu0 %v1216, 91
      %v1224 = vpop.permute.xlu0 %1223
      %vm1225 = vcmask 744448
      %v1226 = vsel %vm1225, %v1218, %v1220
      %v1227 = vsel %vm1225, %v1220, %v1222
      %v1228 = vsel %vm1225, %v1222, %v1224
      %v1230 = vsel %vm346, %v1198, 0
      %v1233 = vsel %vm350, %v1226, 0
      %v1236 = vsel %vm350, %v1227, 0
      %v1239 = vsel %vm350, %v1228, 0
      %1241 = vmatprep.subr.bf16.mxu0 %v1236
      %1242 = vmatpush1.bf16.msra.mxu0 %v1233
      %1243 = vmatprep.subr.bf16.mxu0 0
      %1244 = vmatpush1.bf16.msra.mxu0 0
      %1245 = vmatprep.subr.bf16.mxu0 0
      %1246 = vmatpush1.bf16.msra.mxu0 0
      %1247 = vmatprep.subr.bf16.mxu0 0
      %1248 = vmatpush1.bf16.msra.mxu0 0
      %1249 = vmatprep.subr.bf16.mxu0 0
      %1250 = vmatpush1.bf16.msra.mxu0 0
      %1251 = vmatprep.subr.bf16.mxu0 0
      %1252 = vmatpush1.bf16.msra.mxu0 0
      %1253 = vmatprep.subr.bf16.mxu0 0
      %1254 = vmatpush1.bf16.msra.mxu0 0
      %1255 = vmatprep.subr.bf16.mxu0 0
      %1256 = vmatpush1.bf16.msra.mxu0 0
      %1257 = vmatprep.subr.bf16.mxu0 0
      %1258 = vmatpush1.bf16.msra.mxu0 0
      %1259 = vmatprep.subr.bf16.mxu0 0
      %1260 = vmatpush1.bf16.msra.mxu0 0
      %1261 = vmatprep.subr.bf16.mxu0 0
      %1262 = vmatpush1.bf16.msra.mxu0 0
      %1263 = vmatprep.subr.bf16.mxu0 0
      %1264 = vmatpush1.bf16.msra.mxu0 0
      %1265 = vmatprep.subr.bf16.mxu0 0
      %1266 = vmatpush1.bf16.msra.mxu0 0
      %1267 = vmatprep.subr.bf16.mxu0 0
      %1268 = vmatpush1.bf16.msra.mxu0 0
      %1269 = vmatprep.subr.bf16.mxu0 0
      %1270 = vmatpush1.bf16.msra.mxu0 0
      %1271 = vmatprep.subr.bf16.mxu0 0
      %1272 = vmatpush1.bf16.msra.mxu0 0
      %1273 = vmatprep.mubr.bf16.mxu0 0
      %1274 = vmatmul.mubr.bf16.gmra.mrb[0].mxu0 %v1230
      %v1275 = vpop.f32.mrb[0].mxu0
      %v1276 = vadd.f32 0.0, %v1275
      %v1277 = vpop.f32.mrb[0].mxu0
      %v1278 = vadd.f32 0.0, %v1277
      %v1279 = vpop.f32.mrb[0].mxu0
      %v1280 = vpop.f32.mrb[0].mxu0
      %1281 = vdwg.mxu0
      %1282 = vmatprep.subr.bf16.mxu0 0
      %1283 = vmatpush1.bf16.msra.mxu0 %v1239
      %1284 = vmatprep.subr.bf16.mxu0 0
      %1285 = vmatpush1.bf16.msra.mxu0 0
      %1286 = vmatprep.subr.bf16.mxu0 0
      %1287 = vmatpush1.bf16.msra.mxu0 0
      %1288 = vmatprep.subr.bf16.mxu0 0
      %1289 = vmatpush1.bf16.msra.mxu0 0
      %1290 = vmatprep.subr.bf16.mxu0 0
      %1291 = vmatpush1.bf16.msra.mxu0 0
      %1292 = vmatprep.subr.bf16.mxu0 0
      %1293 = vmatpush1.bf16.msra.mxu0 0
      %1294 = vmatprep.subr.bf16.mxu0 0
      %1295 = vmatpush1.bf16.msra.mxu0 0
      %1296 = vmatprep.subr.bf16.mxu0 0
      %1297 = vmatpush1.bf16.msra.mxu0 0
      %1298 = vmatprep.subr.bf16.mxu0 0
      %1299 = vmatpush1.bf16.msra.mxu0 0
      %1300 = vmatprep.subr.bf16.mxu0 0
      %1301 = vmatpush1.bf16.msra.mxu0 0
      %1302 = vmatprep.subr.bf16.mxu0 0
      %1303 = vmatpush1.bf16.msra.mxu0 0
      %1304 = vmatprep.subr.bf16.mxu0 0
      %1305 = vmatpush1.bf16.msra.mxu0 0
      %1306 = vmatprep.subr.bf16.mxu0 0
      %1307 = vmatpush1.bf16.msra.mxu0 0
      %1308 = vmatprep.subr.bf16.mxu0 0
      %1309 = vmatpush1.bf16.msra.mxu0 0
      %1310 = vmatprep.subr.bf16.mxu0 0
      %1311 = vmatpush1.bf16.msra.mxu0 0
      %1312 = vmatprep.subr.bf16.mxu0 0
      %1313 = vmatpush1.bf16.msra.mxu0 0
      %1314 = vmatprep.mubr.bf16.mxu0 0
      %1315 = vmatmul.mubr.bf16.gmra.mrb[0].mxu0 %v1230
      %v1316 = vpop.f32.mrb[0].mxu0
      %v1317 = vadd.f32 0.0, %v1316
      %v1318 = vpop.f32.mrb[0].mxu0
      %v1319 = vpop.f32.mrb[0].mxu0
      %v1320 = vpop.f32.mrb[0].mxu0
      %1321 = vdwg.mxu0
      %v1322 = vadd.f32 %v1193, %v1276
      %v1323 = vadd.f32 %v1194, %v1278
      %v1324 = vadd.f32 %v1195, %v1317
      %v1325 = vld [vmem:[%s278] sm:$0xff]
      %s1326 = scalar_lea.vmem %s285, 32
      %v1327 = vld [vmem:[%s1326] sm:$0xf]
      %v1329 = vcombine.high %v1325, %v1325
      %v1331 = vunpack.c.l.s4 1983009808
      %v1332 = vunpack.c.0.s8 %v1331
      %v1333 = vlaneseq
      %v1334 = vshrl.u32 %v1333, 7
      %v1335 = vsub.s32 %v1332, %v1334
      %v1336 = vrot.slane %v1325, %v1335
      %v1338 = vunpack.c.l.s4 1983009808
      %v1339 = vunpack.c.0.s8 %v1338
      %v1340 = vlaneseq
      %v1341 = vshrl.u32 %v1340, 7
      %v1342 = vsub.s32 %v1339, %v1341
      %v1343 = vrot.slane %v1329, %v1342
      %v1344 = vcombine.high %v1336, %v1336
      %v1345 = vcombine.high %v1343, %v1343
      %1346 = vrot.lane.b32.xlu0 %v1336, 90
      %v1347 = vpop.permute.xlu0 %1346
      %1348 = vrot.lane.b32.xlu0 %v1344, 90
      %v1349 = vpop.permute.xlu0 %1348
      %1350 = vrot.lane.b32.xlu0 %v1343, 90
      %v1351 = vpop.permute.xlu0 %1350
      %1352 = vrot.lane.b32.xlu0 %v1345, 90
      %v1353 = vpop.permute.xlu0 %1352
      %vm1354 = vcmask 736256
      %v1355 = vsel %vm1354, %v1347, %v1349
      %v1356 = vsel %vm1354, %v1349, %v1351
      %v1357 = vsel %vm1354, %v1351, %v1353
      %v1359 = vsel %vm346, %v1327, 0
      %v1362 = vsel %vm350, %v1355, 0
      %v1365 = vsel %vm350, %v1356, 0
      %v1368 = vsel %vm350, %v1357, 0
      %1370 = vmatprep.subr.bf16.mxu0 %v1365
      %1371 = vmatpush1.bf16.msra.mxu0 %v1362
      %1372 = vmatprep.subr.bf16.mxu0 0
      %1373 = vmatpush1.bf16.msra.mxu0 0
      %1374 = vmatprep.subr.bf16.mxu0 0
      %1375 = vmatpush1.bf16.msra.mxu0 0
      %1376 = vmatprep.subr.bf16.mxu0 0
      %1377 = vmatpush1.bf16.msra.mxu0 0
      %1378 = vmatprep.subr.bf16.mxu0 0
      %1379 = vmatpush1.bf16.msra.mxu0 0
      %1380 = vmatprep.subr.bf16.mxu0 0
      %1381 = vmatpush1.bf16.msra.mxu0 0
      %1382 = vmatprep.subr.bf16.mxu0 0
      %1383 = vmatpush1.bf16.msra.mxu0 0
      %1384 = vmatprep.subr.bf16.mxu0 0
      %1385 = vmatpush1.bf16.msra.mxu0 0
      %1386 = vmatprep.subr.bf16.mxu0 0
      %1387 = vmatpush1.bf16.msra.mxu0 0
      %1388 = vmatprep.subr.bf16.mxu0 0
      %1389 = vmatpush1.bf16.msra.mxu0 0
      %1390 = vmatprep.subr.bf16.mxu0 0
      %1391 = vmatpush1.bf16.msra.mxu0 0
      %1392 = vmatprep.subr.bf16.mxu0 0
      %1393 = vmatpush1.bf16.msra.mxu0 0
      %1394 = vmatprep.subr.bf16.mxu0 0
      %1395 = vmatpush1.bf16.msra.mxu0 0
      %1396 = vmatprep.subr.bf16.mxu0 0
      %1397 = vmatpush1.bf16.msra.mxu0 0
      %1398 = vmatprep.subr.bf16.mxu0 0
      %1399 = vmatpush1.bf16.msra.mxu0 0
      %1400 = vmatprep.subr.bf16.mxu0 0
      %1401 = vmatpush1.bf16.msra.mxu0 0
      %1402 = vmatprep.mubr.bf16.mxu0 0
      %1403 = vmatmul.mubr.bf16.gmra.mrb[0].mxu0 %v1359
      %v1404 = vpop.f32.mrb[0].mxu0
      %v1405 = vadd.f32 0.0, %v1404
      %v1406 = vpop.f32.mrb[0].mxu0
      %v1407 = vadd.f32 0.0, %v1406
      %v1408 = vpop.f32.mrb[0].mxu0
      %v1409 = vpop.f32.mrb[0].mxu0
      %1410 = vdwg.mxu0
      %1411 = vmatprep.subr.bf16.mxu0 0
      %1412 = vmatpush1.bf16.msra.mxu0 %v1368
      %1413 = vmatprep.subr.bf16.mxu0 0
      %1414 = vmatpush1.bf16.msra.mxu0 0
      %1415 = vmatprep.subr.bf16.mxu0 0
      %1416 = vmatpush1.bf16.msra.mxu0 0
      %1417 = vmatprep.subr.bf16.mxu0 0
      %1418 = vmatpush1.bf16.msra.mxu0 0
      %1419 = vmatprep.subr.bf16.mxu0 0
      %1420 = vmatpush1.bf16.msra.mxu0 0
      %1421 = vmatprep.subr.bf16.mxu0 0
      %1422 = vmatpush1.bf16.msra.mxu0 0
      %1423 = vmatprep.subr.bf16.mxu0 0
      %1424 = vmatpush1.bf16.msra.mxu0 0
      %1425 = vmatprep.subr.bf16.mxu0 0
      %1426 = vmatpush1.bf16.msra.mxu0 0
      %1427 = vmatprep.subr.bf16.mxu0 0
      %1428 = vmatpush1.bf16.msra.mxu0 0
      %1429 = vmatprep.subr.bf16.mxu0 0
      %1430 = vmatpush1.bf16.msra.mxu0 0
      %1431 = vmatprep.subr.bf16.mxu0 0
      %1432 = vmatpush1.bf16.msra.mxu0 0
      %1433 = vmatprep.subr.bf16.mxu0 0
      %1434 = vmatpush1.bf16.msra.mxu0 0
      %1435 = vmatprep.subr.bf16.mxu0 0
      %1436 = vmatpush1.bf16.msra.mxu0 0
      %1437 = vmatprep.subr.bf16.mxu0 0
      %1438 = vmatpush1.bf16.msra.mxu0 0
      %1439 = vmatprep.subr.bf16.mxu0 0
      %1440 = vmatpush1.bf16.msra.mxu0 0
      %1441 = vmatprep.subr.bf16.mxu0 0
      %1442 = vmatpush1.bf16.msra.mxu0 0
      %1443 = vmatprep.mubr.bf16.mxu0 0
      %1444 = vmatmul.mubr.bf16.gmra.mrb[0].mxu0 %v1359
      %v1445 = vpop.f32.mrb[0].mxu0
      %v1446 = vadd.f32 0.0, %v1445
      %v1447 = vpop.f32.mrb[0].mxu0
      %v1448 = vpop.f32.mrb[0].mxu0
      %v1449 = vpop.f32.mrb[0].mxu0
      %1450 = vdwg.mxu0
      %v1451 = vadd.f32 %v1322, %v1405
      %v1452 = vadd.f32 %v1323, %v1407
      %v1453 = vadd.f32 %v1324, %v1446
      %v1454 = vld [vmem:[#allocation2] sm:$0xff]
      %v1455 = vld [vmem:[#allocation2 + $0x8] sm:$0xff]
      %v1456 = vld [vmem:[#allocation2 + $0x10] sm:$0xff]
      %v1457 = vadd.f32 %v1454, %v1451
      %v1458 = vadd.f32 %v1455, %v1452
      %v1459 = vadd.f32 %v1456, %v1453
      %1460 = vst [vmem:[#allocation2] sm:$0xff] %v1457
      %1461 = vst [vmem:[#allocation2 + $0x8] sm:$0xff] %v1458
      %1462 = vst [vmem:[#allocation2 + $0x10] sm:$0xff] %v1459
      // Predicated region
      $region41: #{bn_conv_mish.1} parent=35 // pred_check
        %p1463 = pneg %p304
      $region42: #{bn_conv_mish.1} parent=35 // pred_check_branch
        %1465 = sbr.rel (%p1463) target = $region44
      $region43: #{bn_conv_mish.1} parent=35 // pred_region
        %v1466 = vld [vmem:[#allocation2] sm:$0xff]
        %v1467 = vld [vmem:[#allocation2 + $0x8] sm:$0xff]
        %v1468 = vld [vmem:[#allocation2 + $0x10] sm:$0xff]
        %v1469 = vld [vmem:[%s289] sm:$0xff]
        %1471 = vset.pattern.permute.xlu0 0
        %1472 = vperm.xlu0 %1471, %v1469
        %v1473 = vpop.permute.xlu0 %1472
        %v1475 = vmul.f32 %v1466, %v1473
        %v1476 = vmul.f32 %v1467, %v1473
        %v1477 = vmul.f32 %v1468, %v1473
        %v1478 = vld [vmem:[%s293] sm:$0xff]
        %1480 = vset.pattern.permute.xlu0 0
        %1481 = vperm.xlu0 %1480, %v1478
        %v1482 = vpop.permute.xlu0 %1481
        %v1484 = vadd.f32 %v1475, %v1482
        %v1485 = vadd.f32 %v1476, %v1482
        %v1486 = vadd.f32 %v1477, %v1482
        %v1487 = vmin.f32 %v1484, 20.0
        %v1488 = vmin.f32 %v1485, 20.0
        %v1489 = vmin.f32 %v1486, 20.0
        %v1490 = vmul.f32 %v1487, 1.442695
        %v1491 = vpow.pop %v1490
        %v1492 = vmul.f32 %v1488, 1.442695
        %v1493 = vpow.pop %v1492
        %v1494 = vmul.f32 %v1489, 1.442695
        %v1495 = vpow.pop %v1494
        %v1496 = vadd.f32 %v1491, 2.0
        %v1497 = vadd.f32 %v1493, 2.0
        %v1498 = vadd.f32 %v1495, 2.0
        %v1499 = vmul.f32 %v1491, %v1496
        %v1500 = vmul.f32 %v1493, %v1497
        %v1501 = vmul.f32 %v1495, %v1498
        %v1502 = vadd.f32 %v1499, 2.0
        %v1503 = vadd.f32 %v1500, 2.0
        %v1504 = vadd.f32 %v1501, 2.0
        %v1505 = vrcp.pop %v1502
        %v1506 = vrcp.pop %v1503
        %v1507 = vrcp.pop %v1504
        %v1508 = vmul.f32 %v1499, %v1505
        %v1509 = vmul.f32 %v1500, %v1506
        %v1510 = vmul.f32 %v1501, %v1507
        %v1511 = vmul.f32 %v1484, %v1508
        %v1512 = vmul.f32 %v1485, %v1509
        %v1513 = vmul.f32 %v1486, %v1510
        %1514 = vst [vmem:[%s302] sm:$0xff] %v1511
        %1515 = vst [vmem:[%s302 + $0x8] sm:$0xff] %v1512
        %1516 = vst [vmem:[%s302 + $0x10] sm:$0xff] %v1513
      $region44: #{bn_conv_mish.1} parent=35 // pred_fallthru
        _
      %p1517 = scmp.lt.s32.totalorder %s20, 1
      %s1518 = scalar_select %p1517, %s20, 1
      %p1519 = scmp.lt.s32.totalorder %s21, 0
      %s1520 = scalar_select %p1519, %s21, 0
      %s1521 = smul.addr %s1520, 3
      %s1522 = smul.addr %s1518, 3
      %s1523 = sadd.s32 %s1521, %s1522
      %s1524 = smul.addr %s1523, 8
      %s1525 = scalar_lea.vmem %s4, %s1524
      // Predicated region
      $region45: #{bn_conv_mish.1} parent=35 // pred_check
        %p1526 = pneg %p162
      $region46: #{bn_conv_mish.1} parent=35 // pred_check_branch
        %1528 = sbr.rel (%p1526) target = $region48
      $region47: #{bn_conv_mish.1} parent=35 // pred_region
        _
      $region48: #{bn_conv_mish.1} parent=35 // pred_fallthru
        _
    $region36: #{bn_conv_mish.1} parent=5 // pred_fallthru
      _
    %p1529 = scmp.le.s32.totalorder 2, %s10
    // Predicated region
    $region49: #{bn_conv_mish.1} parent=5 // pred_check
      %p1530 = pneg %p1529
    $region50: #{bn_conv_mish.1} parent=5 // pred_check_branch
      %1532 = sbr.rel (%p1530) target = $region52
    $region51: #{bn_conv_mish.1} parent=5 // pred_region
      %s1533 = ssub.s32 %s10, 2
      // Predicated region
      $region53: #{bn_conv_mish.1} parent=51 // pred_check
        %p1534 = pneg %p168
      $region54: #{bn_conv_mish.1} parent=51 // pred_check_branch
        %1536 = sbr.rel (%p1534) target = $region56
      $region55: #{bn_conv_mish.1} parent=51 // pred_region
        %p1537 = scmp.lt.s32.totalorder %s23, 1
        %s1538 = scalar_select %p1537, %s23, 1
        %p1539 = scmp.lt.s32.totalorder %s24, 0
        %s1540 = scalar_select %p1539, %s24, 0
        %s1541 = smul.addr %s1540, 3
        %s1542 = smul.addr %s1538, 3
        %s1543 = sadd.s32 %s1541, %s1542
        %s1544 = smul.addr %s1543, 8
        %s1545 = scalar_lea.vmem %s4, %s1544
      $region56: #{bn_conv_mish.1} parent=51 // pred_fallthru
        _
    $region52: #{bn_conv_mish.1} parent=5 // pred_fallthru
      _
  $region6: #{bn_conv_mish.1} parent=0 // loop_footer
    %s14 = sadd.s32 1, %s10
  $region7: #{bn_conv_mish.1} parent=0 // loop_footer_branch
    %9 = sbr.rel target = $region3
  $region8: #{bn_conv_mish.1} parent=0 // loop_exit
    _

</llo_original>
